<compile_context>
chip_gen: v5e
topology: v5e:2x2
jax: 0.10.0
libtpu: 0.0.40
codegen_flags: <defaults>
</compile_context>

<pallas_src>
import math
import functools
import numpy as np

import jax
import jax.numpy as jnp
from jax.experimental import pallas as pl
from jax.experimental.pallas import tpu as pltpu

# ----------------------- FLAGES (small synthetic config) --------------------
NUM_SPECTRUM = 4      # FLAGES.num_spectrum
PAN_SIZE     = 16     # FLAGES.pan_size
PATCH_SIZE   = 4      # FLAGES.patch_size
EMBED_DIM    = 32     # FLAGES.embed_dim
NUM_HEADS    = 4      # FLAGES.num_heads
DEPTH        = 2      # FLAGES.depth
MLP_RATIO    = 4
LN_EPS       = 1e-5   # nn.LayerNorm default

NUM_PATCHES  = (PAN_SIZE // PATCH_SIZE) ** 2                 # 16
HEAD_DIM     = EMBED_DIM // NUM_HEADS                        # 8
HIDDEN       = EMBED_DIM * MLP_RATIO                         # 128
OUT_C        = NUM_SPECTRUM * PATCH_SIZE * PATCH_SIZE        # 64
OUT_PAD      = 128                                           # lane-dense store
MS_SIZE      = PAN_SIZE // 4                                 # 4
IN_FEATS     = NUM_SPECTRUM * MS_SIZE * MS_SIZE + PAN_SIZE * PAN_SIZE   # 320


# ----------------------------- in-kernel math --------------------------------
def _recip(x):
    # EUP approx reciprocal + one Newton-Raphson step -> ~f32-accurate 1/x.
    r = pl.reciprocal(x, approx=True)
    return r * (2.0 - x * r)


def _layernorm(x, g, b):
    mu = jnp.mean(x, axis=-1, keepdims=True)
    d = x - mu
    var = jnp.mean(d * d, axis=-1, keepdims=True)
    return d * jax.lax.rsqrt(var + LN_EPS) * g + b


def _erf_approx(x):
    # TODO(synk): torch.erf has no direct Pallas/Mosaic lowering; use the
    # Abramowitz & Stegun 7.1.26 polynomial (max abs err ~1.5e-7), built from
    # mul/add/exp plus an approx-reciprocal+NR divide (EUP slot).
    a1, a2, a3, a4, a5 = (0.254829592, -0.284496736, 1.421413741,
                          -1.453152027, 1.061405429)
    p = 0.3275911
    sgn = jnp.where(x < 0.0, -1.0, 1.0)
    ax = jnp.abs(x)
    t = _recip(1.0 + p * ax)
    poly = ((((a5 * t + a4) * t + a3) * t + a2) * t + a1) * t
    return sgn * (1.0 - poly * jnp.exp(-ax * ax))


def _gelu(x):
    # Exact-erf GELU from the reference: x * 0.5 * (1 + erf(x / sqrt(2)))
    return x * 0.5 * (1.0 + _erf_approx(x * (1.0 / math.sqrt(2.0))))


def _dot(a, b):
    return jnp.dot(a, b, preferred_element_type=jnp.float32)


# ------------------------------- fused kernel ---------------------------------
def fused_transformer_kernel(x_ref, w_in_ref, wfc2_ref, whead_ref,
                             vec32_ref, vec128_ref, o_ref, *, bt):
    # One grid step == `bt` batch elements; everything stays resident in VMEM.
    N = x_ref.shape[1]
    C = x_ref.shape[2]
    H = NUM_HEADS
    hd = C // H
    R = bt * N

    vecs = vec32_ref[...]                      # (6*DEPTH+2, C)  packed vectors
    v128 = vec128_ref[...]                     # (DEPTH+1, 128)

    xf = x_ref[...].reshape(R, C)              # flatten batch*tokens -> rows

    for d in range(DEPTH):                     # DEPTH=2, unrolled
        base = 6 * d
        g1    = vecs[base + 0: base + 1]
        b1    = vecs[base + 1: base + 2]
        bproj = vecs[base + 2: base + 3]
        g2    = vecs[base + 3: base + 4]
        b2    = vecs[base + 4: base + 5]
        bfc2  = vecs[base + 5: base + 6]
        bfc1  = v128[d: d + 1]

        # packed per-block weights, lane-aligned: [qkv(0:96)|pad|fc1(128:256)|proj(256:288)]
        w = w_in_ref[d]                        # (C, 4C + HIDDEN + C)
        wqkv  = w[:, :3 * C]                   # (C, 3C)
        wfc1  = w[:, 4 * C: 4 * C + HIDDEN]    # (C, HIDDEN)
        wproj = w[:, 4 * C + HIDDEN:]          # (C, C)
        wfc2  = wfc2_ref[d]                    # (HIDDEN, C)

        # --- attention: LN1 -> one QKV matmul -> per-head softmax -> one proj ---
        xn = _layernorm(xf, g1, b1)
        qkv = _dot(xn, wqkv)                   # (R, 3C) single MXU weight load
        head_outs = []
        for h in range(H):
            qh = qkv[:, h * hd:(h + 1) * hd].reshape(bt, N, hd)          # scale folded in
            kh = qkv[:, C + h * hd: C + (h + 1) * hd].reshape(bt, N, hd)
            vh = qkv[:, 2 * C + h * hd: 2 * C + (h + 1) * hd].reshape(bt, N, hd)
            att = jnp.einsum('bqd,bkd->bqk', qh, kh,
                             preferred_element_type=jnp.float32)
            att = att - jnp.max(att, axis=-1, keepdims=True)
            p = jnp.exp(att)
            p = p * _recip(jnp.sum(p, axis=-1, keepdims=True))
            oh = jnp.einsum('bqk,bkd->bqd', p, vh,
                            preferred_element_type=jnp.float32)
            head_outs.append(oh.reshape(R, hd))
        attn = jnp.concatenate(head_outs, axis=-1)     # (R, C) == concat(heads)
        xf = xf + _dot(attn, wproj) + bproj            # one (R,C)@(C,C) proj

        # --- MLP branch: LN2 -> fc1 -> gelu -> fc2 ---
        xn2 = _layernorm(xf, g2, b2)
        h1 = _gelu(_dot(xn2, wfc1) + bfc1)
        xf = xf + _dot(h1, wfc2) + bfc2

    # --- final LayerNorm + 1x1 conv (per-token linear), lane-dense output ---
    gN = vecs[6 * DEPTH + 0: 6 * DEPTH + 1]
    bN = vecs[6 * DEPTH + 1: 6 * DEPTH + 2]
    bd = v128[DEPTH: DEPTH + 1]
    xn = _layernorm(xf, gN, bN)
    out = _dot(xn, whead_ref[...]) + bd                # (R, 128), cols >=64 are 0
    o_ref[...] = out.reshape(bt, N, OUT_PAD)


# --------------------------- pallas_call wrapper -------------------------------
def _const_spec(shape):
    nd = len(shape)
    return pl.BlockSpec(tuple(shape), lambda b, _nd=nd: (0,) * _nd)


def fused_forward(x0, p):
    B, N, C = x0.shape
    # Target ~128 rows per grid step; keep >=2 steps when B>=2 (v7x: 2 TCs).
    bt = max(1, min(B, max(1, 128 // N)))
    if B >= 2:
        bt = max(1, min(bt, B // 2))
    while B % bt:
        bt -= 1
    grid = B // bt

    weights = (p["w_in"], p["w_fc2"], p["w_head"], p["vec32"], p["vec128"])
    return pl.pallas_call(
        functools.partial(fused_transformer_kernel, bt=bt),
        out_shape=jax.ShapeDtypeStruct((B, N, OUT_PAD), jnp.float32),
        grid=(grid,),
        in_specs=[pl.BlockSpec((bt, N, C), lambda b: (b, 0, 0))]
                 + [_const_spec(w.shape) for w in weights],
        out_specs=pl.BlockSpec((bt, N, OUT_PAD), lambda b: (b, 0, 0)),
        compiler_params=pltpu.CompilerParams(
            dimension_semantics=("parallel",)),   # v7x shards steps over 2 TCs
    )(x0, *weights)


# --------------------- front-end linear map (built at init) --------------------
def _cubic(t, a=-0.75):
    at = abs(t)
    if at <= 1.0:
        return (a + 2.0) * at ** 3 - (a + 3.0) * at ** 2 + 1.0
    if at < 2.0:
        return a * at ** 3 - 5.0 * a * at ** 2 + 8.0 * a * at - 4.0 * a
    return 0.0


def bicubic_matrix(n_in, n_out):
    # nn.Upsample(mode='bicubic', align_corners=True) -- matches the module spec;
    # a = -0.75, clamped-border taps; separable/linear so it is a matmul.
    M = np.zeros((n_out, n_in), np.float32)
    for i in range(n_out):
        x = i * (n_in - 1) / (n_out - 1) if n_out > 1 else 0.0
        x0 = math.floor(x)
        t = x - x0
        for k in range(-1, 3):
            idx = min(max(x0 + k, 0), n_in - 1)
            M[i, idx] += _cubic(k - t)
    return M


def _patchify_single(img, p):
    # CHW -> (Np, Cin*p*p), row-major patch order, channel-major inside a patch.
    Cin, Hh, Ww = img.shape
    x = img.reshape(Cin, Hh // p, p, Ww // p, p)
    x = jnp.transpose(x, (1, 3, 0, 2, 4))
    return x.reshape((Hh // p) * (Ww // p), Cin * p * p)


def build_embed_matrix(patch_w):
    """Compose bicubic-upsample + concat + patchify + patch-embed conv into a
    single (IN_FEATS, Np*C) matrix by linearizing the reference pipeline."""
    M = jnp.asarray(bicubic_matrix(MS_SIZE, PAN_SIZE))

    def fn(inp_flat):
        ms = inp_flat[:NUM_SPECTRUM * MS_SIZE * MS_SIZE].reshape(
            NUM_SPECTRUM, MS_SIZE, MS_SIZE)
        pan = inp_flat[NUM_SPECTRUM * MS_SIZE * MS_SIZE:].reshape(
            1, PAN_SIZE, PAN_SIZE)
        up = jnp.einsum('oi,cij->coj', M, ms)
        up = jnp.einsum('pj,coj->cop', M, up)
        img = jnp.concatenate([up, pan], axis=0)
        patches = _patchify_single(img, PATCH_SIZE)          # (Np, Cin*p*p)
        return (patches @ patch_w).reshape(-1)               # (Np*C,)

    # fn is linear, so rows of vmap(fn)(I) are exactly the matrix rows.
    return jax.vmap(fn)(jnp.eye(IN_FEATS, dtype=jnp.float32))


# ------------------------------ forward ----------------------------------------
def transpan_forward(params, ms, pan):
    B = ms.shape[0]
    # 1-2) upsample + concat + patchify + patch-embed conv, folded into one
    #      precomputed matmul; bias = conv bias + pos_embed.
    inp = jnp.concatenate([ms.reshape(B, -1), pan.reshape(B, -1)], axis=1)
    emb = inp @ params["embed_w"] + params["embed_b"][None, :]
    x0 = emb.reshape(B, NUM_PATCHES, EMBED_DIM)

    # 3-4) transformer blocks + final LN + 1x1 conv: one fused Pallas kernel.
    y = fused_forward(x0, params)[..., :OUT_C]               # drop lane padding

    # 5) PixelShuffle(patch_size) — pure reshape/transpose glue.
    Ns = PAN_SIZE // PATCH_SIZE
    p = PATCH_SIZE
    y = y.reshape(B, Ns, Ns, NUM_SPECTRUM, p, p)
    y = jnp.transpose(y, (0, 3, 1, 4, 2, 5)).reshape(
        B, NUM_SPECTRUM, Ns * p, Ns * p)
    return y


# ------------------------------ params -----------------------------------------
def init_params(key):
    cin = NUM_SPECTRUM + 1
    std = 0.02
    keys = jax.random.split(key, 2 + DEPTH)

    patch_w = std * jax.random.normal(
        keys[0], (cin * PATCH_SIZE * PATCH_SIZE, EMBED_DIM), jnp.float32)
    patch_b = jnp.zeros((EMBED_DIM,), jnp.float32)
    pos = jnp.zeros((NUM_PATCHES, EMBED_DIM), jnp.float32)   # nn.Parameter(zeros)

    # final 1x1 conv head, zero-padded to 128 output lanes for lane-dense store
    wd = std * jax.random.normal(keys[1], (EMBED_DIM, OUT_C), jnp.float32)
    w_head = jnp.zeros((EMBED_DIM, OUT_PAD), jnp.float32).at[:, :OUT_C].set(wd)
    bd_pad = jnp.zeros((OUT_PAD,), jnp.float32)              # conv bias = 0

    scale = HEAD_DIM ** (-0.5)
    w_in, w_fc2, vec32, vec128 = [], [], [], []
    for d in range(DEPTH):
        bk = jax.random.split(keys[2 + d], 4)
        wqkv = std * jax.random.normal(bk[0], (EMBED_DIM, 3 * EMBED_DIM), jnp.float32)
        wqkv = wqkv.at[:, :EMBED_DIM].multiply(scale)        # fold attn scale into Wq
        wproj = std * jax.random.normal(bk[1], (EMBED_DIM, EMBED_DIM), jnp.float32)
        wfc1 = std * jax.random.normal(bk[2], (EMBED_DIM, HIDDEN), jnp.float32)
        wfc2 = std * jax.random.normal(bk[3], (HIDDEN, EMBED_DIM), jnp.float32)

        # lane-aligned packed weights: [qkv(0:96) | pad(96:128) | fc1(128:256) | proj(256:288)]
        w_in.append(jnp.concatenate(
            [wqkv, jnp.zeros((EMBED_DIM, EMBED_DIM), jnp.float32), wfc1, wproj],
            axis=1))
        w_fc2.append(wfc2)

        vec32 += [jnp.ones((EMBED_DIM,), jnp.float32),    # g1
                  jnp.zeros((EMBED_DIM,), jnp.float32),   # b1
                  jnp.zeros((EMBED_DIM,), jnp.float32),   # bproj
                  jnp.ones((EMBED_DIM,), jnp.float32),    # g2
                  jnp.zeros((EMBED_DIM,), jnp.float32),   # b2
                  jnp.zeros((EMBED_DIM,), jnp.float32)]   # bfc2
        vec128.append(jnp.zeros((HIDDEN,), jnp.float32))  # bfc1
    vec32 += [jnp.ones((EMBED_DIM,), jnp.float32),        # gN
              jnp.zeros((EMBED_DIM,), jnp.float32)]       # bN
    vec128.append(bd_pad)                                 # bd (padded)

    return {
        "embed_w": build_embed_matrix(patch_w),           # (320, Np*C)
        "embed_b": (pos + patch_b[None, :]).reshape(-1),  # (Np*C,)
        "w_in": jnp.stack(w_in),                          # (DEPTH, 32, 288)
        "w_fc2": jnp.stack(w_fc2),                        # (DEPTH, 128, 32)
        "w_head": w_head,                                 # (32, 128)
        "vec32": jnp.stack(vec32),                        # (6*DEPTH+2, 32)
        "vec128": jnp.stack(vec128),                      # (DEPTH+1, 128)
    }


# ------------------------------- main -------------------------------------------
if __name__ == "__main__":
    key = jax.random.PRNGKey(0)
    kp, kms, kpan = jax.random.split(key, 3)

    params = init_params(kp)
    B = 2
    ms = jax.random.normal(kms, (B, NUM_SPECTRUM, MS_SIZE, MS_SIZE), jnp.float32)
    pan = jax.random.normal(kpan, (B, 1, PAN_SIZE, PAN_SIZE), jnp.float32)

    forward = jax.jit(transpan_forward)
    out = forward(params, ms, pan)
    out = jax.block_until_ready(out)

    assert out.shape == (B, NUM_SPECTRUM, PAN_SIZE, PAN_SIZE), out.shape
    assert bool(jnp.all(jnp.isfinite(out)))
    print("KERNEL_OK")
</pallas_src>

<mosaic_0001>
module attributes {stable_mosaic.version = 11 : i64} {
  func.func @fused_transformer_kernel(%arg0: i32, %arg1: memref<1x16x32xf32, #tpu.memory_space<vmem>>, %arg2: memref<2x32x288xf32, #tpu.memory_space<vmem>>, %arg3: memref<2x128x32xf32, #tpu.memory_space<vmem>>, %arg4: memref<32x128xf32, #tpu.memory_space<vmem>>, %arg5: memref<14x32xf32, #tpu.memory_space<vmem>>, %arg6: memref<3x128xf32, #tpu.memory_space<vmem>>, %arg7: memref<1x16x128xf32, #tpu.memory_space<vmem>>) attributes {dimension_semantics = [#tpu.dimension_semantics<parallel>], iteration_bounds = array<i64: 2>, scalar_prefetch = 0 : i64, scratch_operands = 0 : i64, tpu.core_type = #tpu.core_type<tc>, window_params = [{transform_indices = @transform_0, window_bounds = array<i64: 1, 16, 32>}, {pipeline_mode = #tpu.pipeline_mode<synchronous>, transform_indices = @transform_1, window_bounds = array<i64: 2, 32, 288>}, {pipeline_mode = #tpu.pipeline_mode<synchronous>, transform_indices = @transform_2, window_bounds = array<i64: 2, 128, 32>}, {pipeline_mode = #tpu.pipeline_mode<synchronous>, transform_indices = @transform_3, window_bounds = array<i64: 32, 128>}, {pipeline_mode = #tpu.pipeline_mode<synchronous>, transform_indices = @transform_4, window_bounds = array<i64: 14, 32>}, {pipeline_mode = #tpu.pipeline_mode<synchronous>, transform_indices = @transform_5, window_bounds = array<i64: 3, 128>}, {transform_indices = @transform_6, window_bounds = array<i64: 1, 16, 128>}]} {
    %c0 = arith.constant 0 : index
    %c0_0 = arith.constant 0 : index
    %0 = vector.load %arg5[%c0, %c0_0] : memref<14x32xf32, #tpu.memory_space<vmem>>, vector<14x32xf32>
    %c0_1 = arith.constant 0 : index
    %c0_2 = arith.constant 0 : index
    %1 = vector.load %arg6[%c0_1, %c0_2] : memref<3x128xf32, #tpu.memory_space<vmem>>, vector<3x128xf32>
    %c0_3 = arith.constant 0 : index
    %c0_4 = arith.constant 0 : index
    %c0_5 = arith.constant 0 : index
    %2 = vector.load %arg1[%c0_3, %c0_4, %c0_5] : memref<1x16x32xf32, #tpu.memory_space<vmem>>, vector<1x16x32xf32>
    %3 = vector.shape_cast %2 : vector<1x16x32xf32> to vector<16x32xf32>
    %4 = vector.extract_strided_slice %0 {offsets = [0, 0], sizes = [1, 32], strides = [1, 1]} : vector<14x32xf32> to vector<1x32xf32>
    %5 = vector.extract_strided_slice %0 {offsets = [1, 0], sizes = [1, 32], strides = [1, 1]} : vector<14x32xf32> to vector<1x32xf32>
    %6 = vector.extract_strided_slice %0 {offsets = [2, 0], sizes = [1, 32], strides = [1, 1]} : vector<14x32xf32> to vector<1x32xf32>
    %7 = vector.extract_strided_slice %0 {offsets = [3, 0], sizes = [1, 32], strides = [1, 1]} : vector<14x32xf32> to vector<1x32xf32>
    %8 = vector.extract_strided_slice %0 {offsets = [4, 0], sizes = [1, 32], strides = [1, 1]} : vector<14x32xf32> to vector<1x32xf32>
    %9 = vector.extract_strided_slice %0 {offsets = [5, 0], sizes = [1, 32], strides = [1, 1]} : vector<14x32xf32> to vector<1x32xf32>
    %10 = vector.extract_strided_slice %1 {offsets = [0, 0], sizes = [1, 128], strides = [1, 1]} : vector<3x128xf32> to vector<1x128xf32>
    %c0_6 = arith.constant 0 : index
    %c0_7 = arith.constant 0 : index
    %c0_8 = arith.constant 0 : index
    %11 = vector.load %arg2[%c0_6, %c0_7, %c0_8] : memref<2x32x288xf32, #tpu.memory_space<vmem>>, vector<1x32x288xf32>
    %12 = vector.shape_cast %11 : vector<1x32x288xf32> to vector<32x288xf32>
    %13 = vector.extract_strided_slice %12 {offsets = [0, 0], sizes = [32, 96], strides = [1, 1]} : vector<32x288xf32> to vector<32x96xf32>
    %14 = vector.extract_strided_slice %12 {offsets = [0, 128], sizes = [32, 128], strides = [1, 1]} : vector<32x288xf32> to vector<32x128xf32>
    %15 = vector.extract_strided_slice %12 {offsets = [0, 256], sizes = [32, 32], strides = [1, 1]} : vector<32x288xf32> to vector<32x32xf32>
    %c0_9 = arith.constant 0 : index
    %c0_10 = arith.constant 0 : index
    %c0_11 = arith.constant 0 : index
    %16 = vector.load %arg3[%c0_9, %c0_10, %c0_11] : memref<2x128x32xf32, #tpu.memory_space<vmem>>, vector<1x128x32xf32>
    %17 = vector.shape_cast %16 : vector<1x128x32xf32> to vector<128x32xf32>
    %cst = arith.constant dense<0.000000e+00> : vector<16xf32>
    %18 = vector.multi_reduction <add>, %3, %cst [1] : vector<16x32xf32> to vector<16xf32>
    %19 = vector.shape_cast %18 : vector<16xf32> to vector<16x1xf32>
    %cst_12 = arith.constant 3.200000e+01 : f32
    %20 = vector.broadcast %cst_12 : f32 to vector<16x1xf32>
    %21 = arith.divf %19, %20 : vector<16x1xf32>
    %22 = vector.broadcast %21 : vector<16x1xf32> to vector<16x32xf32>
    %23 = arith.subf %3, %22 : vector<16x32xf32>
    %24 = arith.mulf %23, %23 : vector<16x32xf32>
    %cst_13 = arith.constant dense<0.000000e+00> : vector<16xf32>
    %25 = vector.multi_reduction <add>, %24, %cst_13 [1] : vector<16x32xf32> to vector<16xf32>
    %26 = vector.shape_cast %25 : vector<16xf32> to vector<16x1xf32>
    %cst_14 = arith.constant 3.200000e+01 : f32
    %27 = vector.broadcast %cst_14 : f32 to vector<16x1xf32>
    %28 = arith.divf %26, %27 : vector<16x1xf32>
    %cst_15 = arith.constant 9.99999974E-6 : f32
    %29 = vector.broadcast %cst_15 : f32 to vector<16x1xf32>
    %30 = arith.addf %28, %29 : vector<16x1xf32>
    %31 = math.rsqrt %30 : vector<16x1xf32>
    %32 = vector.broadcast %31 : vector<16x1xf32> to vector<16x32xf32>
    %33 = arith.mulf %23, %32 : vector<16x32xf32>
    %34 = vector.broadcast %4 : vector<1x32xf32> to vector<16x32xf32>
    %35 = arith.mulf %33, %34 : vector<16x32xf32>
    %36 = vector.broadcast %5 : vector<1x32xf32> to vector<16x32xf32>
    %37 = arith.addf %35, %36 : vector<16x32xf32>
    %cst_16 = arith.constant dense<0.000000e+00> : vector<16x96xf32>
    %38 = tpu.matmul %37, %13, %cst_16 {dimension_numbers = #tpu.dot_dimension_numbers<[1], [0], [0], [1], [0, 0, 1, 1], [], []>} : vector<16x32xf32>, vector<32x96xf32>, vector<16x96xf32> -> vector<16x96xf32>
    %39 = vector.extract_strided_slice %38 {offsets = [0, 0], sizes = [16, 8], strides = [1, 1]} : vector<16x96xf32> to vector<16x8xf32>
    %40 = vector.shape_cast %39 : vector<16x8xf32> to vector<1x16x8xf32>
    %41 = vector.extract_strided_slice %38 {offsets = [0, 32], sizes = [16, 8], strides = [1, 1]} : vector<16x96xf32> to vector<16x8xf32>
    %42 = vector.shape_cast %41 : vector<16x8xf32> to vector<1x16x8xf32>
    %43 = vector.extract_strided_slice %38 {offsets = [0, 64], sizes = [16, 8], strides = [1, 1]} : vector<16x96xf32> to vector<16x8xf32>
    %44 = vector.shape_cast %43 : vector<16x8xf32> to vector<1x16x8xf32>
    "tpu.trace_start"() <{level = 10 : i32, message = "bqd,bkd->bqk"}> : () -> ()
    %cst_17 = arith.constant dense<0.000000e+00> : vector<1x16x16xf32>
    %45 = tpu.matmul %40, %42, %cst_17 {dimension_numbers = #tpu.dot_dimension_numbers<[2], [2], [1], [1], [0, 0, 0, 1, 1, 1], [0], [0]>} : vector<1x16x8xf32>, vector<1x16x8xf32>, vector<1x16x16xf32> -> vector<1x16x16xf32>
    "tpu.trace_stop"() : () -> ()
    %cst_18 = arith.constant dense<0xFF800000> : vector<1x16xf32>
    %46 = vector.multi_reduction <maximumf>, %45, %cst_18 [2] : vector<1x16x16xf32> to vector<1x16xf32>
    %47 = vector.shape_cast %46 : vector<1x16xf32> to vector<1x16x1xf32>
    %48 = vector.broadcast %47 : vector<1x16x1xf32> to vector<1x16x16xf32>
    %49 = arith.subf %45, %48 : vector<1x16x16xf32>
    %50 = math.exp %49 : vector<1x16x16xf32>
    %cst_19 = arith.constant dense<0.000000e+00> : vector<1x16xf32>
    %51 = vector.multi_reduction <add>, %50, %cst_19 [2] : vector<1x16x16xf32> to vector<1x16xf32>
    %52 = vector.shape_cast %51 : vector<1x16xf32> to vector<1x16x1xf32>
    %53 = tpu.reciprocal %52 {approx = true} : vector<1x16x1xf32> -> vector<1x16x1xf32>
    %54 = arith.mulf %52, %53 : vector<1x16x1xf32>
    %cst_20 = arith.constant 2.000000e+00 : f32
    %55 = vector.broadcast %cst_20 : f32 to vector<1x16x1xf32>
    %56 = arith.subf %55, %54 : vector<1x16x1xf32>
    %57 = arith.mulf %53, %56 : vector<1x16x1xf32>
    %58 = vector.broadcast %57 : vector<1x16x1xf32> to vector<1x16x16xf32>
    %59 = arith.mulf %50, %58 : vector<1x16x16xf32>
    "tpu.trace_start"() <{level = 10 : i32, message = "bqk,bkd->bqd"}> : () -> ()
    %cst_21 = arith.constant dense<0.000000e+00> : vector<1x16x8xf32>
    %60 = tpu.matmul %59, %44, %cst_21 {dimension_numbers = #tpu.dot_dimension_numbers<[2], [1], [1], [2], [0, 0, 0, 1, 1, 2], [0], [0]>} : vector<1x16x16xf32>, vector<1x16x8xf32>, vector<1x16x8xf32> -> vector<1x16x8xf32>
    "tpu.trace_stop"() : () -> ()
    %61 = vector.shape_cast %60 : vector<1x16x8xf32> to vector<16x8xf32>
    %62 = vector.extract_strided_slice %38 {offsets = [0, 8], sizes = [16, 8], strides = [1, 1]} : vector<16x96xf32> to vector<16x8xf32>
    %63 = vector.shape_cast %62 : vector<16x8xf32> to vector<1x16x8xf32>
    %64 = vector.extract_strided_slice %38 {offsets = [0, 40], sizes = [16, 8], strides = [1, 1]} : vector<16x96xf32> to vector<16x8xf32>
    %65 = vector.shape_cast %64 : vector<16x8xf32> to vector<1x16x8xf32>
    %66 = vector.extract_strided_slice %38 {offsets = [0, 72], sizes = [16, 8], strides = [1, 1]} : vector<16x96xf32> to vector<16x8xf32>
    %67 = vector.shape_cast %66 : vector<16x8xf32> to vector<1x16x8xf32>
    "tpu.trace_start"() <{level = 10 : i32, message = "bqd,bkd->bqk"}> : () -> ()
    %cst_22 = arith.constant dense<0.000000e+00> : vector<1x16x16xf32>
    %68 = tpu.matmul %63, %65, %cst_22 {dimension_numbers = #tpu.dot_dimension_numbers<[2], [2], [1], [1], [0, 0, 0, 1, 1, 1], [0], [0]>} : vector<1x16x8xf32>, vector<1x16x8xf32>, vector<1x16x16xf32> -> vector<1x16x16xf32>
    "tpu.trace_stop"() : () -> ()
    %cst_23 = arith.constant dense<0xFF800000> : vector<1x16xf32>
    %69 = vector.multi_reduction <maximumf>, %68, %cst_23 [2] : vector<1x16x16xf32> to vector<1x16xf32>
    %70 = vector.shape_cast %69 : vector<1x16xf32> to vector<1x16x1xf32>
    %71 = vector.broadcast %70 : vector<1x16x1xf32> to vector<1x16x16xf32>
    %72 = arith.subf %68, %71 : vector<1x16x16xf32>
    %73 = math.exp %72 : vector<1x16x16xf32>
    %cst_24 = arith.constant dense<0.000000e+00> : vector<1x16xf32>
    %74 = vector.multi_reduction <add>, %73, %cst_24 [2] : vector<1x16x16xf32> to vector<1x16xf32>
    %75 = vector.shape_cast %74 : vector<1x16xf32> to vector<1x16x1xf32>
    %76 = tpu.reciprocal %75 {approx = true} : vector<1x16x1xf32> -> vector<1x16x1xf32>
    %77 = arith.mulf %75, %76 : vector<1x16x1xf32>
    %cst_25 = arith.constant 2.000000e+00 : f32
    %78 = vector.broadcast %cst_25 : f32 to vector<1x16x1xf32>
    %79 = arith.subf %78, %77 : vector<1x16x1xf32>
    %80 = arith.mulf %76, %79 : vector<1x16x1xf32>
    %81 = vector.broadcast %80 : vector<1x16x1xf32> to vector<1x16x16xf32>
    %82 = arith.mulf %73, %81 : vector<1x16x16xf32>
    "tpu.trace_start"() <{level = 10 : i32, message = "bqk,bkd->bqd"}> : () -> ()
    %cst_26 = arith.constant dense<0.000000e+00> : vector<1x16x8xf32>
    %83 = tpu.matmul %82, %67, %cst_26 {dimension_numbers = #tpu.dot_dimension_numbers<[2], [1], [1], [2], [0, 0, 0, 1, 1, 2], [0], [0]>} : vector<1x16x16xf32>, vector<1x16x8xf32>, vector<1x16x8xf32> -> vector<1x16x8xf32>
    "tpu.trace_stop"() : () -> ()
    %84 = vector.shape_cast %83 : vector<1x16x8xf32> to vector<16x8xf32>
    %85 = vector.extract_strided_slice %38 {offsets = [0, 16], sizes = [16, 8], strides = [1, 1]} : vector<16x96xf32> to vector<16x8xf32>
    %86 = vector.shape_cast %85 : vector<16x8xf32> to vector<1x16x8xf32>
    %87 = vector.extract_strided_slice %38 {offsets = [0, 48], sizes = [16, 8], strides = [1, 1]} : vector<16x96xf32> to vector<16x8xf32>
    %88 = vector.shape_cast %87 : vector<16x8xf32> to vector<1x16x8xf32>
    %89 = vector.extract_strided_slice %38 {offsets = [0, 80], sizes = [16, 8], strides = [1, 1]} : vector<16x96xf32> to vector<16x8xf32>
    %90 = vector.shape_cast %89 : vector<16x8xf32> to vector<1x16x8xf32>
    "tpu.trace_start"() <{level = 10 : i32, message = "bqd,bkd->bqk"}> : () -> ()
    %cst_27 = arith.constant dense<0.000000e+00> : vector<1x16x16xf32>
    %91 = tpu.matmul %86, %88, %cst_27 {dimension_numbers = #tpu.dot_dimension_numbers<[2], [2], [1], [1], [0, 0, 0, 1, 1, 1], [0], [0]>} : vector<1x16x8xf32>, vector<1x16x8xf32>, vector<1x16x16xf32> -> vector<1x16x16xf32>
    "tpu.trace_stop"() : () -> ()
    %cst_28 = arith.constant dense<0xFF800000> : vector<1x16xf32>
    %92 = vector.multi_reduction <maximumf>, %91, %cst_28 [2] : vector<1x16x16xf32> to vector<1x16xf32>
    %93 = vector.shape_cast %92 : vector<1x16xf32> to vector<1x16x1xf32>
    %94 = vector.broadcast %93 : vector<1x16x1xf32> to vector<1x16x16xf32>
    %95 = arith.subf %91, %94 : vector<1x16x16xf32>
    %96 = math.exp %95 : vector<1x16x16xf32>
    %cst_29 = arith.constant dense<0.000000e+00> : vector<1x16xf32>
    %97 = vector.multi_reduction <add>, %96, %cst_29 [2] : vector<1x16x16xf32> to vector<1x16xf32>
    %98 = vector.shape_cast %97 : vector<1x16xf32> to vector<1x16x1xf32>
    %99 = tpu.reciprocal %98 {approx = true} : vector<1x16x1xf32> -> vector<1x16x1xf32>
    %100 = arith.mulf %98, %99 : vector<1x16x1xf32>
    %cst_30 = arith.constant 2.000000e+00 : f32
    %101 = vector.broadcast %cst_30 : f32 to vector<1x16x1xf32>
    %102 = arith.subf %101, %100 : vector<1x16x1xf32>
    %103 = arith.mulf %99, %102 : vector<1x16x1xf32>
    %104 = vector.broadcast %103 : vector<1x16x1xf32> to vector<1x16x16xf32>
    %105 = arith.mulf %96, %104 : vector<1x16x16xf32>
    "tpu.trace_start"() <{level = 10 : i32, message = "bqk,bkd->bqd"}> : () -> ()
    %cst_31 = arith.constant dense<0.000000e+00> : vector<1x16x8xf32>
    %106 = tpu.matmul %105, %90, %cst_31 {dimension_numbers = #tpu.dot_dimension_numbers<[2], [1], [1], [2], [0, 0, 0, 1, 1, 2], [0], [0]>} : vector<1x16x16xf32>, vector<1x16x8xf32>, vector<1x16x8xf32> -> vector<1x16x8xf32>
    "tpu.trace_stop"() : () -> ()
    %107 = vector.shape_cast %106 : vector<1x16x8xf32> to vector<16x8xf32>
    %108 = vector.extract_strided_slice %38 {offsets = [0, 24], sizes = [16, 8], strides = [1, 1]} : vector<16x96xf32> to vector<16x8xf32>
    %109 = vector.shape_cast %108 : vector<16x8xf32> to vector<1x16x8xf32>
    %110 = vector.extract_strided_slice %38 {offsets = [0, 56], sizes = [16, 8], strides = [1, 1]} : vector<16x96xf32> to vector<16x8xf32>
    %111 = vector.shape_cast %110 : vector<16x8xf32> to vector<1x16x8xf32>
    %112 = vector.extract_strided_slice %38 {offsets = [0, 88], sizes = [16, 8], strides = [1, 1]} : vector<16x96xf32> to vector<16x8xf32>
    %113 = vector.shape_cast %112 : vector<16x8xf32> to vector<1x16x8xf32>
    "tpu.trace_start"() <{level = 10 : i32, message = "bqd,bkd->bqk"}> : () -> ()
    %cst_32 = arith.constant dense<0.000000e+00> : vector<1x16x16xf32>
    %114 = tpu.matmul %109, %111, %cst_32 {dimension_numbers = #tpu.dot_dimension_numbers<[2], [2], [1], [1], [0, 0, 0, 1, 1, 1], [0], [0]>} : vector<1x16x8xf32>, vector<1x16x8xf32>, vector<1x16x16xf32> -> vector<1x16x16xf32>
    "tpu.trace_stop"() : () -> ()
    %cst_33 = arith.constant dense<0xFF800000> : vector<1x16xf32>
    %115 = vector.multi_reduction <maximumf>, %114, %cst_33 [2] : vector<1x16x16xf32> to vector<1x16xf32>
    %116 = vector.shape_cast %115 : vector<1x16xf32> to vector<1x16x1xf32>
    %117 = vector.broadcast %116 : vector<1x16x1xf32> to vector<1x16x16xf32>
    %118 = arith.subf %114, %117 : vector<1x16x16xf32>
    %119 = math.exp %118 : vector<1x16x16xf32>
    %cst_34 = arith.constant dense<0.000000e+00> : vector<1x16xf32>
    %120 = vector.multi_reduction <add>, %119, %cst_34 [2] : vector<1x16x16xf32> to vector<1x16xf32>
    %121 = vector.shape_cast %120 : vector<1x16xf32> to vector<1x16x1xf32>
    %122 = tpu.reciprocal %121 {approx = true} : vector<1x16x1xf32> -> vector<1x16x1xf32>
    %123 = arith.mulf %121, %122 : vector<1x16x1xf32>
    %cst_35 = arith.constant 2.000000e+00 : f32
    %124 = vector.broadcast %cst_35 : f32 to vector<1x16x1xf32>
    %125 = arith.subf %124, %123 : vector<1x16x1xf32>
    %126 = arith.mulf %122, %125 : vector<1x16x1xf32>
    %127 = vector.broadcast %126 : vector<1x16x1xf32> to vector<1x16x16xf32>
    %128 = arith.mulf %119, %127 : vector<1x16x16xf32>
    "tpu.trace_start"() <{level = 10 : i32, message = "bqk,bkd->bqd"}> : () -> ()
    %cst_36 = arith.constant dense<0.000000e+00> : vector<1x16x8xf32>
    %129 = tpu.matmul %128, %113, %cst_36 {dimension_numbers = #tpu.dot_dimension_numbers<[2], [1], [1], [2], [0, 0, 0, 1, 1, 2], [0], [0]>} : vector<1x16x16xf32>, vector<1x16x8xf32>, vector<1x16x8xf32> -> vector<1x16x8xf32>
    "tpu.trace_stop"() : () -> ()
    %130 = vector.shape_cast %129 : vector<1x16x8xf32> to vector<16x8xf32>
    %131 = tpu.concatenate %61, %84, %107, %130 in 1 : vector<16x8xf32>, vector<16x8xf32>, vector<16x8xf32>, vector<16x8xf32> -> vector<16x32xf32>
    %cst_37 = arith.constant dense<0.000000e+00> : vector<16x32xf32>
    %132 = tpu.matmul %131, %15, %cst_37 {dimension_numbers = #tpu.dot_dimension_numbers<[1], [0], [0], [1], [0, 0, 1, 1], [], []>} : vector<16x32xf32>, vector<32x32xf32>, vector<16x32xf32> -> vector<16x32xf32>
    %133 = arith.addf %3, %132 : vector<16x32xf32>
    %134 = vector.broadcast %6 : vector<1x32xf32> to vector<16x32xf32>
    %135 = arith.addf %133, %134 : vector<16x32xf32>
    %cst_38 = arith.constant dense<0.000000e+00> : vector<16xf32>
    %136 = vector.multi_reduction <add>, %135, %cst_38 [1] : vector<16x32xf32> to vector<16xf32>
    %137 = vector.shape_cast %136 : vector<16xf32> to vector<16x1xf32>
    %cst_39 = arith.constant 3.200000e+01 : f32
    %138 = vector.broadcast %cst_39 : f32 to vector<16x1xf32>
    %139 = arith.divf %137, %138 : vector<16x1xf32>
    %140 = vector.broadcast %139 : vector<16x1xf32> to vector<16x32xf32>
    %141 = arith.subf %135, %140 : vector<16x32xf32>
    %142 = arith.mulf %141, %141 : vector<16x32xf32>
    %cst_40 = arith.constant dense<0.000000e+00> : vector<16xf32>
    %143 = vector.multi_reduction <add>, %142, %cst_40 [1] : vector<16x32xf32> to vector<16xf32>
    %144 = vector.shape_cast %143 : vector<16xf32> to vector<16x1xf32>
    %cst_41 = arith.constant 3.200000e+01 : f32
    %145 = vector.broadcast %cst_41 : f32 to vector<16x1xf32>
    %146 = arith.divf %144, %145 : vector<16x1xf32>
    %cst_42 = arith.constant 9.99999974E-6 : f32
    %147 = vector.broadcast %cst_42 : f32 to vector<16x1xf32>
    %148 = arith.addf %146, %147 : vector<16x1xf32>
    %149 = math.rsqrt %148 : vector<16x1xf32>
    %150 = vector.broadcast %149 : vector<16x1xf32> to vector<16x32xf32>
    %151 = arith.mulf %141, %150 : vector<16x32xf32>
    %152 = vector.broadcast %7 : vector<1x32xf32> to vector<16x32xf32>
    %153 = arith.mulf %151, %152 : vector<16x32xf32>
    %154 = vector.broadcast %8 : vector<1x32xf32> to vector<16x32xf32>
    %155 = arith.addf %153, %154 : vector<16x32xf32>
    %cst_43 = arith.constant dense<0.000000e+00> : vector<16x128xf32>
    %156 = tpu.matmul %155, %14, %cst_43 {dimension_numbers = #tpu.dot_dimension_numbers<[1], [0], [0], [1], [0, 0, 1, 1], [], []>} : vector<16x32xf32>, vector<32x128xf32>, vector<16x128xf32> -> vector<16x128xf32>
    %157 = vector.broadcast %10 : vector<1x128xf32> to vector<16x128xf32>
    %158 = arith.addf %156, %157 : vector<16x128xf32>
    %cst_44 = arith.constant 5.000000e-01 : f32
    %159 = vector.broadcast %cst_44 : f32 to vector<16x128xf32>
    %160 = arith.mulf %158, %159 : vector<16x128xf32>
    %cst_45 = arith.constant 0.707106769 : f32
    %161 = vector.broadcast %cst_45 : f32 to vector<16x128xf32>
    %162 = arith.mulf %158, %161 : vector<16x128xf32>
    %cst_46 = arith.constant 0.000000e+00 : f32
    %163 = vector.broadcast %cst_46 : f32 to vector<16x128xf32>
    %164 = arith.cmpf olt, %162, %163 : vector<16x128xf32>
    %cst_47 = arith.constant -1.000000e+00 : f32
    %cst_48 = arith.constant 1.000000e+00 : f32
    %165 = vector.broadcast %cst_47 : f32 to vector<16x128xf32>
    %166 = vector.broadcast %cst_48 : f32 to vector<16x128xf32>
    %167 = arith.select %164, %165, %166 : vector<16x128xi1>, vector<16x128xf32>
    %168 = math.absf %162 : vector<16x128xf32>
    %cst_49 = arith.constant 0.327591091 : f32
    %169 = vector.broadcast %cst_49 : f32 to vector<16x128xf32>
    %170 = arith.mulf %169, %168 : vector<16x128xf32>
    %cst_50 = arith.constant 1.000000e+00 : f32
    %171 = vector.broadcast %cst_50 : f32 to vector<16x128xf32>
    %172 = arith.addf %171, %170 : vector<16x128xf32>
    %173 = tpu.reciprocal %172 {approx = true} : vector<16x128xf32> -> vector<16x128xf32>
    %174 = arith.mulf %172, %173 : vector<16x128xf32>
    %cst_51 = arith.constant 2.000000e+00 : f32
    %175 = vector.broadcast %cst_51 : f32 to vector<16x128xf32>
    %176 = arith.subf %175, %174 : vector<16x128xf32>
    %177 = arith.mulf %173, %176 : vector<16x128xf32>
    %cst_52 = arith.constant 1.06140542 : f32
    %178 = vector.broadcast %cst_52 : f32 to vector<16x128xf32>
    %179 = arith.mulf %178, %177 : vector<16x128xf32>
    %cst_53 = arith.constant -1.45315206 : f32
    %180 = vector.broadcast %cst_53 : f32 to vector<16x128xf32>
    %181 = arith.addf %179, %180 : vector<16x128xf32>
    %182 = arith.mulf %181, %177 : vector<16x128xf32>
    %cst_54 = arith.constant 1.42141378 : f32
    %183 = vector.broadcast %cst_54 : f32 to vector<16x128xf32>
    %184 = arith.addf %182, %183 : vector<16x128xf32>
    %185 = arith.mulf %184, %177 : vector<16x128xf32>
    %cst_55 = arith.constant -0.284496725 : f32
    %186 = vector.broadcast %cst_55 : f32 to vector<16x128xf32>
    %187 = arith.addf %185, %186 : vector<16x128xf32>
    %188 = arith.mulf %187, %177 : vector<16x128xf32>
    %cst_56 = arith.constant 0.254829586 : f32
    %189 = vector.broadcast %cst_56 : f32 to vector<16x128xf32>
    %190 = arith.addf %188, %189 : vector<16x128xf32>
    %191 = arith.mulf %190, %177 : vector<16x128xf32>
    %cst_57 = arith.constant 0.000000e+00 : f32
    %192 = vector.broadcast %cst_57 : f32 to vector<16x128xf32>
    %193 = arith.subf %192, %168 : vector<16x128xf32>
    %194 = arith.mulf %193, %168 : vector<16x128xf32>
    %195 = math.exp %194 : vector<16x128xf32>
    %196 = arith.mulf %191, %195 : vector<16x128xf32>
    %cst_58 = arith.constant 1.000000e+00 : f32
    %197 = vector.broadcast %cst_58 : f32 to vector<16x128xf32>
    %198 = arith.subf %197, %196 : vector<16x128xf32>
    %199 = arith.mulf %167, %198 : vector<16x128xf32>
    %cst_59 = arith.constant 1.000000e+00 : f32
    %200 = vector.broadcast %cst_59 : f32 to vector<16x128xf32>
    %201 = arith.addf %200, %199 : vector<16x128xf32>
    %202 = arith.mulf %160, %201 : vector<16x128xf32>
    %cst_60 = arith.constant dense<0.000000e+00> : vector<16x32xf32>
    %203 = tpu.matmul %202, %17, %cst_60 {dimension_numbers = #tpu.dot_dimension_numbers<[1], [0], [0], [1], [0, 0, 1, 1], [], []>} : vector<16x128xf32>, vector<128x32xf32>, vector<16x32xf32> -> vector<16x32xf32>
    %204 = arith.addf %135, %203 : vector<16x32xf32>
    %205 = vector.broadcast %9 : vector<1x32xf32> to vector<16x32xf32>
    %206 = arith.addf %204, %205 : vector<16x32xf32>
    %207 = vector.extract_strided_slice %0 {offsets = [6, 0], sizes = [1, 32], strides = [1, 1]} : vector<14x32xf32> to vector<1x32xf32>
    %208 = vector.extract_strided_slice %0 {offsets = [7, 0], sizes = [1, 32], strides = [1, 1]} : vector<14x32xf32> to vector<1x32xf32>
    %209 = vector.extract_strided_slice %0 {offsets = [8, 0], sizes = [1, 32], strides = [1, 1]} : vector<14x32xf32> to vector<1x32xf32>
    %210 = vector.extract_strided_slice %0 {offsets = [9, 0], sizes = [1, 32], strides = [1, 1]} : vector<14x32xf32> to vector<1x32xf32>
    %211 = vector.extract_strided_slice %0 {offsets = [10, 0], sizes = [1, 32], strides = [1, 1]} : vector<14x32xf32> to vector<1x32xf32>
    %212 = vector.extract_strided_slice %0 {offsets = [11, 0], sizes = [1, 32], strides = [1, 1]} : vector<14x32xf32> to vector<1x32xf32>
    %213 = vector.extract_strided_slice %1 {offsets = [1, 0], sizes = [1, 128], strides = [1, 1]} : vector<3x128xf32> to vector<1x128xf32>
    %c1 = arith.constant 1 : index
    %c0_61 = arith.constant 0 : index
    %c0_62 = arith.constant 0 : index
    %214 = vector.load %arg2[%c1, %c0_61, %c0_62] : memref<2x32x288xf32, #tpu.memory_space<vmem>>, vector<1x32x288xf32>
    %215 = vector.shape_cast %214 : vector<1x32x288xf32> to vector<32x288xf32>
    %216 = vector.extract_strided_slice %215 {offsets = [0, 0], sizes = [32, 96], strides = [1, 1]} : vector<32x288xf32> to vector<32x96xf32>
    %217 = vector.extract_strided_slice %215 {offsets = [0, 128], sizes = [32, 128], strides = [1, 1]} : vector<32x288xf32> to vector<32x128xf32>
    %218 = vector.extract_strided_slice %215 {offsets = [0, 256], sizes = [32, 32], strides = [1, 1]} : vector<32x288xf32> to vector<32x32xf32>
    %c1_63 = arith.constant 1 : index
    %c0_64 = arith.constant 0 : index
    %c0_65 = arith.constant 0 : index
    %219 = vector.load %arg3[%c1_63, %c0_64, %c0_65] : memref<2x128x32xf32, #tpu.memory_space<vmem>>, vector<1x128x32xf32>
    %220 = vector.shape_cast %219 : vector<1x128x32xf32> to vector<128x32xf32>
    %cst_66 = arith.constant dense<0.000000e+00> : vector<16xf32>
    %221 = vector.multi_reduction <add>, %206, %cst_66 [1] : vector<16x32xf32> to vector<16xf32>
    %222 = vector.shape_cast %221 : vector<16xf32> to vector<16x1xf32>
    %cst_67 = arith.constant 3.200000e+01 : f32
    %223 = vector.broadcast %cst_67 : f32 to vector<16x1xf32>
    %224 = arith.divf %222, %223 : vector<16x1xf32>
    %225 = vector.broadcast %224 : vector<16x1xf32> to vector<16x32xf32>
    %226 = arith.subf %206, %225 : vector<16x32xf32>
    %227 = arith.mulf %226, %226 : vector<16x32xf32>
    %cst_68 = arith.constant dense<0.000000e+00> : vector<16xf32>
    %228 = vector.multi_reduction <add>, %227, %cst_68 [1] : vector<16x32xf32> to vector<16xf32>
    %229 = vector.shape_cast %228 : vector<16xf32> to vector<16x1xf32>
    %cst_69 = arith.constant 3.200000e+01 : f32
    %230 = vector.broadcast %cst_69 : f32 to vector<16x1xf32>
    %231 = arith.divf %229, %230 : vector<16x1xf32>
    %cst_70 = arith.constant 9.99999974E-6 : f32
    %232 = vector.broadcast %cst_70 : f32 to vector<16x1xf32>
    %233 = arith.addf %231, %232 : vector<16x1xf32>
    %234 = math.rsqrt %233 : vector<16x1xf32>
    %235 = vector.broadcast %234 : vector<16x1xf32> to vector<16x32xf32>
    %236 = arith.mulf %226, %235 : vector<16x32xf32>
    %237 = vector.broadcast %207 : vector<1x32xf32> to vector<16x32xf32>
    %238 = arith.mulf %236, %237 : vector<16x32xf32>
    %239 = vector.broadcast %208 : vector<1x32xf32> to vector<16x32xf32>
    %240 = arith.addf %238, %239 : vector<16x32xf32>
    %cst_71 = arith.constant dense<0.000000e+00> : vector<16x96xf32>
    %241 = tpu.matmul %240, %216, %cst_71 {dimension_numbers = #tpu.dot_dimension_numbers<[1], [0], [0], [1], [0, 0, 1, 1], [], []>} : vector<16x32xf32>, vector<32x96xf32>, vector<16x96xf32> -> vector<16x96xf32>
    %242 = vector.extract_strided_slice %241 {offsets = [0, 0], sizes = [16, 8], strides = [1, 1]} : vector<16x96xf32> to vector<16x8xf32>
    %243 = vector.shape_cast %242 : vector<16x8xf32> to vector<1x16x8xf32>
    %244 = vector.extract_strided_slice %241 {offsets = [0, 32], sizes = [16, 8], strides = [1, 1]} : vector<16x96xf32> to vector<16x8xf32>
    %245 = vector.shape_cast %244 : vector<16x8xf32> to vector<1x16x8xf32>
    %246 = vector.extract_strided_slice %241 {offsets = [0, 64], sizes = [16, 8], strides = [1, 1]} : vector<16x96xf32> to vector<16x8xf32>
    %247 = vector.shape_cast %246 : vector<16x8xf32> to vector<1x16x8xf32>
    "tpu.trace_start"() <{level = 10 : i32, message = "bqd,bkd->bqk"}> : () -> ()
    %cst_72 = arith.constant dense<0.000000e+00> : vector<1x16x16xf32>
    %248 = tpu.matmul %243, %245, %cst_72 {dimension_numbers = #tpu.dot_dimension_numbers<[2], [2], [1], [1], [0, 0, 0, 1, 1, 1], [0], [0]>} : vector<1x16x8xf32>, vector<1x16x8xf32>, vector<1x16x16xf32> -> vector<1x16x16xf32>
    "tpu.trace_stop"() : () -> ()
    %cst_73 = arith.constant dense<0xFF800000> : vector<1x16xf32>
    %249 = vector.multi_reduction <maximumf>, %248, %cst_73 [2] : vector<1x16x16xf32> to vector<1x16xf32>
    %250 = vector.shape_cast %249 : vector<1x16xf32> to vector<1x16x1xf32>
    %251 = vector.broadcast %250 : vector<1x16x1xf32> to vector<1x16x16xf32>
    %252 = arith.subf %248, %251 : vector<1x16x16xf32>
    %253 = math.exp %252 : vector<1x16x16xf32>
    %cst_74 = arith.constant dense<0.000000e+00> : vector<1x16xf32>
    %254 = vector.multi_reduction <add>, %253, %cst_74 [2] : vector<1x16x16xf32> to vector<1x16xf32>
    %255 = vector.shape_cast %254 : vector<1x16xf32> to vector<1x16x1xf32>
    %256 = tpu.reciprocal %255 {approx = true} : vector<1x16x1xf32> -> vector<1x16x1xf32>
    %257 = arith.mulf %255, %256 : vector<1x16x1xf32>
    %cst_75 = arith.constant 2.000000e+00 : f32
    %258 = vector.broadcast %cst_75 : f32 to vector<1x16x1xf32>
    %259 = arith.subf %258, %257 : vector<1x16x1xf32>
    %260 = arith.mulf %256, %259 : vector<1x16x1xf32>
    %261 = vector.broadcast %260 : vector<1x16x1xf32> to vector<1x16x16xf32>
    %262 = arith.mulf %253, %261 : vector<1x16x16xf32>
    "tpu.trace_start"() <{level = 10 : i32, message = "bqk,bkd->bqd"}> : () -> ()
    %cst_76 = arith.constant dense<0.000000e+00> : vector<1x16x8xf32>
    %263 = tpu.matmul %262, %247, %cst_76 {dimension_numbers = #tpu.dot_dimension_numbers<[2], [1], [1], [2], [0, 0, 0, 1, 1, 2], [0], [0]>} : vector<1x16x16xf32>, vector<1x16x8xf32>, vector<1x16x8xf32> -> vector<1x16x8xf32>
    "tpu.trace_stop"() : () -> ()
    %264 = vector.shape_cast %263 : vector<1x16x8xf32> to vector<16x8xf32>
    %265 = vector.extract_strided_slice %241 {offsets = [0, 8], sizes = [16, 8], strides = [1, 1]} : vector<16x96xf32> to vector<16x8xf32>
    %266 = vector.shape_cast %265 : vector<16x8xf32> to vector<1x16x8xf32>
    %267 = vector.extract_strided_slice %241 {offsets = [0, 40], sizes = [16, 8], strides = [1, 1]} : vector<16x96xf32> to vector<16x8xf32>
    %268 = vector.shape_cast %267 : vector<16x8xf32> to vector<1x16x8xf32>
    %269 = vector.extract_strided_slice %241 {offsets = [0, 72], sizes = [16, 8], strides = [1, 1]} : vector<16x96xf32> to vector<16x8xf32>
    %270 = vector.shape_cast %269 : vector<16x8xf32> to vector<1x16x8xf32>
    "tpu.trace_start"() <{level = 10 : i32, message = "bqd,bkd->bqk"}> : () -> ()
    %cst_77 = arith.constant dense<0.000000e+00> : vector<1x16x16xf32>
    %271 = tpu.matmul %266, %268, %cst_77 {dimension_numbers = #tpu.dot_dimension_numbers<[2], [2], [1], [1], [0, 0, 0, 1, 1, 1], [0], [0]>} : vector<1x16x8xf32>, vector<1x16x8xf32>, vector<1x16x16xf32> -> vector<1x16x16xf32>
    "tpu.trace_stop"() : () -> ()
    %cst_78 = arith.constant dense<0xFF800000> : vector<1x16xf32>
    %272 = vector.multi_reduction <maximumf>, %271, %cst_78 [2] : vector<1x16x16xf32> to vector<1x16xf32>
    %273 = vector.shape_cast %272 : vector<1x16xf32> to vector<1x16x1xf32>
    %274 = vector.broadcast %273 : vector<1x16x1xf32> to vector<1x16x16xf32>
    %275 = arith.subf %271, %274 : vector<1x16x16xf32>
    %276 = math.exp %275 : vector<1x16x16xf32>
    %cst_79 = arith.constant dense<0.000000e+00> : vector<1x16xf32>
    %277 = vector.multi_reduction <add>, %276, %cst_79 [2] : vector<1x16x16xf32> to vector<1x16xf32>
    %278 = vector.shape_cast %277 : vector<1x16xf32> to vector<1x16x1xf32>
    %279 = tpu.reciprocal %278 {approx = true} : vector<1x16x1xf32> -> vector<1x16x1xf32>
    %280 = arith.mulf %278, %279 : vector<1x16x1xf32>
    %cst_80 = arith.constant 2.000000e+00 : f32
    %281 = vector.broadcast %cst_80 : f32 to vector<1x16x1xf32>
    %282 = arith.subf %281, %280 : vector<1x16x1xf32>
    %283 = arith.mulf %279, %282 : vector<1x16x1xf32>
    %284 = vector.broadcast %283 : vector<1x16x1xf32> to vector<1x16x16xf32>
    %285 = arith.mulf %276, %284 : vector<1x16x16xf32>
    "tpu.trace_start"() <{level = 10 : i32, message = "bqk,bkd->bqd"}> : () -> ()
    %cst_81 = arith.constant dense<0.000000e+00> : vector<1x16x8xf32>
    %286 = tpu.matmul %285, %270, %cst_81 {dimension_numbers = #tpu.dot_dimension_numbers<[2], [1], [1], [2], [0, 0, 0, 1, 1, 2], [0], [0]>} : vector<1x16x16xf32>, vector<1x16x8xf32>, vector<1x16x8xf32> -> vector<1x16x8xf32>
    "tpu.trace_stop"() : () -> ()
    %287 = vector.shape_cast %286 : vector<1x16x8xf32> to vector<16x8xf32>
    %288 = vector.extract_strided_slice %241 {offsets = [0, 16], sizes = [16, 8], strides = [1, 1]} : vector<16x96xf32> to vector<16x8xf32>
    %289 = vector.shape_cast %288 : vector<16x8xf32> to vector<1x16x8xf32>
    %290 = vector.extract_strided_slice %241 {offsets = [0, 48], sizes = [16, 8], strides = [1, 1]} : vector<16x96xf32> to vector<16x8xf32>
    %291 = vector.shape_cast %290 : vector<16x8xf32> to vector<1x16x8xf32>
    %292 = vector.extract_strided_slice %241 {offsets = [0, 80], sizes = [16, 8], strides = [1, 1]} : vector<16x96xf32> to vector<16x8xf32>
    %293 = vector.shape_cast %292 : vector<16x8xf32> to vector<1x16x8xf32>
    "tpu.trace_start"() <{level = 10 : i32, message = "bqd,bkd->bqk"}> : () -> ()
    %cst_82 = arith.constant dense<0.000000e+00> : vector<1x16x16xf32>
    %294 = tpu.matmul %289, %291, %cst_82 {dimension_numbers = #tpu.dot_dimension_numbers<[2], [2], [1], [1], [0, 0, 0, 1, 1, 1], [0], [0]>} : vector<1x16x8xf32>, vector<1x16x8xf32>, vector<1x16x16xf32> -> vector<1x16x16xf32>
    "tpu.trace_stop"() : () -> ()
    %cst_83 = arith.constant dense<0xFF800000> : vector<1x16xf32>
    %295 = vector.multi_reduction <maximumf>, %294, %cst_83 [2] : vector<1x16x16xf32> to vector<1x16xf32>
    %296 = vector.shape_cast %295 : vector<1x16xf32> to vector<1x16x1xf32>
    %297 = vector.broadcast %296 : vector<1x16x1xf32> to vector<1x16x16xf32>
    %298 = arith.subf %294, %297 : vector<1x16x16xf32>
    %299 = math.exp %298 : vector<1x16x16xf32>
    %cst_84 = arith.constant dense<0.000000e+00> : vector<1x16xf32>
    %300 = vector.multi_reduction <add>, %299, %cst_84 [2] : vector<1x16x16xf32> to vector<1x16xf32>
    %301 = vector.shape_cast %300 : vector<1x16xf32> to vector<1x16x1xf32>
    %302 = tpu.reciprocal %301 {approx = true} : vector<1x16x1xf32> -> vector<1x16x1xf32>
    %303 = arith.mulf %301, %302 : vector<1x16x1xf32>
    %cst_85 = arith.constant 2.000000e+00 : f32
    %304 = vector.broadcast %cst_85 : f32 to vector<1x16x1xf32>
    %305 = arith.subf %304, %303 : vector<1x16x1xf32>
    %306 = arith.mulf %302, %305 : vector<1x16x1xf32>
    %307 = vector.broadcast %306 : vector<1x16x1xf32> to vector<1x16x16xf32>
    %308 = arith.mulf %299, %307 : vector<1x16x16xf32>
    "tpu.trace_start"() <{level = 10 : i32, message = "bqk,bkd->bqd"}> : () -> ()
    %cst_86 = arith.constant dense<0.000000e+00> : vector<1x16x8xf32>
    %309 = tpu.matmul %308, %293, %cst_86 {dimension_numbers = #tpu.dot_dimension_numbers<[2], [1], [1], [2], [0, 0, 0, 1, 1, 2], [0], [0]>} : vector<1x16x16xf32>, vector<1x16x8xf32>, vector<1x16x8xf32> -> vector<1x16x8xf32>
    "tpu.trace_stop"() : () -> ()
    %310 = vector.shape_cast %309 : vector<1x16x8xf32> to vector<16x8xf32>
    %311 = vector.extract_strided_slice %241 {offsets = [0, 24], sizes = [16, 8], strides = [1, 1]} : vector<16x96xf32> to vector<16x8xf32>
    %312 = vector.shape_cast %311 : vector<16x8xf32> to vector<1x16x8xf32>
    %313 = vector.extract_strided_slice %241 {offsets = [0, 56], sizes = [16, 8], strides = [1, 1]} : vector<16x96xf32> to vector<16x8xf32>
    %314 = vector.shape_cast %313 : vector<16x8xf32> to vector<1x16x8xf32>
    %315 = vector.extract_strided_slice %241 {offsets = [0, 88], sizes = [16, 8], strides = [1, 1]} : vector<16x96xf32> to vector<16x8xf32>
    %316 = vector.shape_cast %315 : vector<16x8xf32> to vector<1x16x8xf32>
    "tpu.trace_start"() <{level = 10 : i32, message = "bqd,bkd->bqk"}> : () -> ()
    %cst_87 = arith.constant dense<0.000000e+00> : vector<1x16x16xf32>
    %317 = tpu.matmul %312, %314, %cst_87 {dimension_numbers = #tpu.dot_dimension_numbers<[2], [2], [1], [1], [0, 0, 0, 1, 1, 1], [0], [0]>} : vector<1x16x8xf32>, vector<1x16x8xf32>, vector<1x16x16xf32> -> vector<1x16x16xf32>
    "tpu.trace_stop"() : () -> ()
    %cst_88 = arith.constant dense<0xFF800000> : vector<1x16xf32>
    %318 = vector.multi_reduction <maximumf>, %317, %cst_88 [2] : vector<1x16x16xf32> to vector<1x16xf32>
    %319 = vector.shape_cast %318 : vector<1x16xf32> to vector<1x16x1xf32>
    %320 = vector.broadcast %319 : vector<1x16x1xf32> to vector<1x16x16xf32>
    %321 = arith.subf %317, %320 : vector<1x16x16xf32>
    %322 = math.exp %321 : vector<1x16x16xf32>
    %cst_89 = arith.constant dense<0.000000e+00> : vector<1x16xf32>
    %323 = vector.multi_reduction <add>, %322, %cst_89 [2] : vector<1x16x16xf32> to vector<1x16xf32>
    %324 = vector.shape_cast %323 : vector<1x16xf32> to vector<1x16x1xf32>
    %325 = tpu.reciprocal %324 {approx = true} : vector<1x16x1xf32> -> vector<1x16x1xf32>
    %326 = arith.mulf %324, %325 : vector<1x16x1xf32>
    %cst_90 = arith.constant 2.000000e+00 : f32
    %327 = vector.broadcast %cst_90 : f32 to vector<1x16x1xf32>
    %328 = arith.subf %327, %326 : vector<1x16x1xf32>
    %329 = arith.mulf %325, %328 : vector<1x16x1xf32>
    %330 = vector.broadcast %329 : vector<1x16x1xf32> to vector<1x16x16xf32>
    %331 = arith.mulf %322, %330 : vector<1x16x16xf32>
    "tpu.trace_start"() <{level = 10 : i32, message = "bqk,bkd->bqd"}> : () -> ()
    %cst_91 = arith.constant dense<0.000000e+00> : vector<1x16x8xf32>
    %332 = tpu.matmul %331, %316, %cst_91 {dimension_numbers = #tpu.dot_dimension_numbers<[2], [1], [1], [2], [0, 0, 0, 1, 1, 2], [0], [0]>} : vector<1x16x16xf32>, vector<1x16x8xf32>, vector<1x16x8xf32> -> vector<1x16x8xf32>
    "tpu.trace_stop"() : () -> ()
    %333 = vector.shape_cast %332 : vector<1x16x8xf32> to vector<16x8xf32>
    %334 = tpu.concatenate %264, %287, %310, %333 in 1 : vector<16x8xf32>, vector<16x8xf32>, vector<16x8xf32>, vector<16x8xf32> -> vector<16x32xf32>
    %cst_92 = arith.constant dense<0.000000e+00> : vector<16x32xf32>
    %335 = tpu.matmul %334, %218, %cst_92 {dimension_numbers = #tpu.dot_dimension_numbers<[1], [0], [0], [1], [0, 0, 1, 1], [], []>} : vector<16x32xf32>, vector<32x32xf32>, vector<16x32xf32> -> vector<16x32xf32>
    %336 = arith.addf %206, %335 : vector<16x32xf32>
    %337 = vector.broadcast %209 : vector<1x32xf32> to vector<16x32xf32>
    %338 = arith.addf %336, %337 : vector<16x32xf32>
    %cst_93 = arith.constant dense<0.000000e+00> : vector<16xf32>
    %339 = vector.multi_reduction <add>, %338, %cst_93 [1] : vector<16x32xf32> to vector<16xf32>
    %340 = vector.shape_cast %339 : vector<16xf32> to vector<16x1xf32>
    %cst_94 = arith.constant 3.200000e+01 : f32
    %341 = vector.broadcast %cst_94 : f32 to vector<16x1xf32>
    %342 = arith.divf %340, %341 : vector<16x1xf32>
    %343 = vector.broadcast %342 : vector<16x1xf32> to vector<16x32xf32>
    %344 = arith.subf %338, %343 : vector<16x32xf32>
    %345 = arith.mulf %344, %344 : vector<16x32xf32>
    %cst_95 = arith.constant dense<0.000000e+00> : vector<16xf32>
    %346 = vector.multi_reduction <add>, %345, %cst_95 [1] : vector<16x32xf32> to vector<16xf32>
    %347 = vector.shape_cast %346 : vector<16xf32> to vector<16x1xf32>
    %cst_96 = arith.constant 3.200000e+01 : f32
    %348 = vector.broadcast %cst_96 : f32 to vector<16x1xf32>
    %349 = arith.divf %347, %348 : vector<16x1xf32>
    %cst_97 = arith.constant 9.99999974E-6 : f32
    %350 = vector.broadcast %cst_97 : f32 to vector<16x1xf32>
    %351 = arith.addf %349, %350 : vector<16x1xf32>
    %352 = math.rsqrt %351 : vector<16x1xf32>
    %353 = vector.broadcast %352 : vector<16x1xf32> to vector<16x32xf32>
    %354 = arith.mulf %344, %353 : vector<16x32xf32>
    %355 = vector.broadcast %210 : vector<1x32xf32> to vector<16x32xf32>
    %356 = arith.mulf %354, %355 : vector<16x32xf32>
    %357 = vector.broadcast %211 : vector<1x32xf32> to vector<16x32xf32>
    %358 = arith.addf %356, %357 : vector<16x32xf32>
    %cst_98 = arith.constant dense<0.000000e+00> : vector<16x128xf32>
    %359 = tpu.matmul %358, %217, %cst_98 {dimension_numbers = #tpu.dot_dimension_numbers<[1], [0], [0], [1], [0, 0, 1, 1], [], []>} : vector<16x32xf32>, vector<32x128xf32>, vector<16x128xf32> -> vector<16x128xf32>
    %360 = vector.broadcast %213 : vector<1x128xf32> to vector<16x128xf32>
    %361 = arith.addf %359, %360 : vector<16x128xf32>
    %cst_99 = arith.constant 5.000000e-01 : f32
    %362 = vector.broadcast %cst_99 : f32 to vector<16x128xf32>
    %363 = arith.mulf %361, %362 : vector<16x128xf32>
    %cst_100 = arith.constant 0.707106769 : f32
    %364 = vector.broadcast %cst_100 : f32 to vector<16x128xf32>
    %365 = arith.mulf %361, %364 : vector<16x128xf32>
    %cst_101 = arith.constant 0.000000e+00 : f32
    %366 = vector.broadcast %cst_101 : f32 to vector<16x128xf32>
    %367 = arith.cmpf olt, %365, %366 : vector<16x128xf32>
    %cst_102 = arith.constant -1.000000e+00 : f32
    %cst_103 = arith.constant 1.000000e+00 : f32
    %368 = vector.broadcast %cst_102 : f32 to vector<16x128xf32>
    %369 = vector.broadcast %cst_103 : f32 to vector<16x128xf32>
    %370 = arith.select %367, %368, %369 : vector<16x128xi1>, vector<16x128xf32>
    %371 = math.absf %365 : vector<16x128xf32>
    %cst_104 = arith.constant 0.327591091 : f32
    %372 = vector.broadcast %cst_104 : f32 to vector<16x128xf32>
    %373 = arith.mulf %372, %371 : vector<16x128xf32>
    %cst_105 = arith.constant 1.000000e+00 : f32
    %374 = vector.broadcast %cst_105 : f32 to vector<16x128xf32>
    %375 = arith.addf %374, %373 : vector<16x128xf32>
    %376 = tpu.reciprocal %375 {approx = true} : vector<16x128xf32> -> vector<16x128xf32>
    %377 = arith.mulf %375, %376 : vector<16x128xf32>
    %cst_106 = arith.constant 2.000000e+00 : f32
    %378 = vector.broadcast %cst_106 : f32 to vector<16x128xf32>
    %379 = arith.subf %378, %377 : vector<16x128xf32>
    %380 = arith.mulf %376, %379 : vector<16x128xf32>
    %cst_107 = arith.constant 1.06140542 : f32
    %381 = vector.broadcast %cst_107 : f32 to vector<16x128xf32>
    %382 = arith.mulf %381, %380 : vector<16x128xf32>
    %cst_108 = arith.constant -1.45315206 : f32
    %383 = vector.broadcast %cst_108 : f32 to vector<16x128xf32>
    %384 = arith.addf %382, %383 : vector<16x128xf32>
    %385 = arith.mulf %384, %380 : vector<16x128xf32>
    %cst_109 = arith.constant 1.42141378 : f32
    %386 = vector.broadcast %cst_109 : f32 to vector<16x128xf32>
    %387 = arith.addf %385, %386 : vector<16x128xf32>
    %388 = arith.mulf %387, %380 : vector<16x128xf32>
    %cst_110 = arith.constant -0.284496725 : f32
    %389 = vector.broadcast %cst_110 : f32 to vector<16x128xf32>
    %390 = arith.addf %388, %389 : vector<16x128xf32>
    %391 = arith.mulf %390, %380 : vector<16x128xf32>
    %cst_111 = arith.constant 0.254829586 : f32
    %392 = vector.broadcast %cst_111 : f32 to vector<16x128xf32>
    %393 = arith.addf %391, %392 : vector<16x128xf32>
    %394 = arith.mulf %393, %380 : vector<16x128xf32>
    %cst_112 = arith.constant 0.000000e+00 : f32
    %395 = vector.broadcast %cst_112 : f32 to vector<16x128xf32>
    %396 = arith.subf %395, %371 : vector<16x128xf32>
    %397 = arith.mulf %396, %371 : vector<16x128xf32>
    %398 = math.exp %397 : vector<16x128xf32>
    %399 = arith.mulf %394, %398 : vector<16x128xf32>
    %cst_113 = arith.constant 1.000000e+00 : f32
    %400 = vector.broadcast %cst_113 : f32 to vector<16x128xf32>
    %401 = arith.subf %400, %399 : vector<16x128xf32>
    %402 = arith.mulf %370, %401 : vector<16x128xf32>
    %cst_114 = arith.constant 1.000000e+00 : f32
    %403 = vector.broadcast %cst_114 : f32 to vector<16x128xf32>
    %404 = arith.addf %403, %402 : vector<16x128xf32>
    %405 = arith.mulf %363, %404 : vector<16x128xf32>
    %cst_115 = arith.constant dense<0.000000e+00> : vector<16x32xf32>
    %406 = tpu.matmul %405, %220, %cst_115 {dimension_numbers = #tpu.dot_dimension_numbers<[1], [0], [0], [1], [0, 0, 1, 1], [], []>} : vector<16x128xf32>, vector<128x32xf32>, vector<16x32xf32> -> vector<16x32xf32>
    %407 = arith.addf %338, %406 : vector<16x32xf32>
    %408 = vector.broadcast %212 : vector<1x32xf32> to vector<16x32xf32>
    %409 = arith.addf %407, %408 : vector<16x32xf32>
    %410 = vector.extract_strided_slice %0 {offsets = [12, 0], sizes = [1, 32], strides = [1, 1]} : vector<14x32xf32> to vector<1x32xf32>
    %411 = vector.extract_strided_slice %0 {offsets = [13, 0], sizes = [1, 32], strides = [1, 1]} : vector<14x32xf32> to vector<1x32xf32>
    %412 = vector.extract_strided_slice %1 {offsets = [2, 0], sizes = [1, 128], strides = [1, 1]} : vector<3x128xf32> to vector<1x128xf32>
    %cst_116 = arith.constant dense<0.000000e+00> : vector<16xf32>
    %413 = vector.multi_reduction <add>, %409, %cst_116 [1] : vector<16x32xf32> to vector<16xf32>
    %414 = vector.shape_cast %413 : vector<16xf32> to vector<16x1xf32>
    %cst_117 = arith.constant 3.200000e+01 : f32
    %415 = vector.broadcast %cst_117 : f32 to vector<16x1xf32>
    %416 = arith.divf %414, %415 : vector<16x1xf32>
    %417 = vector.broadcast %416 : vector<16x1xf32> to vector<16x32xf32>
    %418 = arith.subf %409, %417 : vector<16x32xf32>
    %419 = arith.mulf %418, %418 : vector<16x32xf32>
    %cst_118 = arith.constant dense<0.000000e+00> : vector<16xf32>
    %420 = vector.multi_reduction <add>, %419, %cst_118 [1] : vector<16x32xf32> to vector<16xf32>
    %421 = vector.shape_cast %420 : vector<16xf32> to vector<16x1xf32>
    %cst_119 = arith.constant 3.200000e+01 : f32
    %422 = vector.broadcast %cst_119 : f32 to vector<16x1xf32>
    %423 = arith.divf %421, %422 : vector<16x1xf32>
    %cst_120 = arith.constant 9.99999974E-6 : f32
    %424 = vector.broadcast %cst_120 : f32 to vector<16x1xf32>
    %425 = arith.addf %423, %424 : vector<16x1xf32>
    %426 = math.rsqrt %425 : vector<16x1xf32>
    %427 = vector.broadcast %426 : vector<16x1xf32> to vector<16x32xf32>
    %428 = arith.mulf %418, %427 : vector<16x32xf32>
    %429 = vector.broadcast %410 : vector<1x32xf32> to vector<16x32xf32>
    %430 = arith.mulf %428, %429 : vector<16x32xf32>
    %431 = vector.broadcast %411 : vector<1x32xf32> to vector<16x32xf32>
    %432 = arith.addf %430, %431 : vector<16x32xf32>
    %c0_121 = arith.constant 0 : index
    %c0_122 = arith.constant 0 : index
    %433 = vector.load %arg4[%c0_121, %c0_122] : memref<32x128xf32, #tpu.memory_space<vmem>>, vector<32x128xf32>
    %cst_123 = arith.constant dense<0.000000e+00> : vector<16x128xf32>
    %434 = tpu.matmul %432, %433, %cst_123 {dimension_numbers = #tpu.dot_dimension_numbers<[1], [0], [0], [1], [0, 0, 1, 1], [], []>} : vector<16x32xf32>, vector<32x128xf32>, vector<16x128xf32> -> vector<16x128xf32>
    %435 = vector.broadcast %412 : vector<1x128xf32> to vector<16x128xf32>
    %436 = arith.addf %434, %435 : vector<16x128xf32>
    %437 = vector.shape_cast %436 : vector<16x128xf32> to vector<1x16x128xf32>
    %c0_124 = arith.constant 0 : index
    %c0_125 = arith.constant 0 : index
    %c0_126 = arith.constant 0 : index
    %438 = vector.load %arg7[%c0_124, %c0_125, %c0_126] : memref<1x16x128xf32, #tpu.memory_space<vmem>>, vector<1x16x128xf32>
    tpu.vector_store %arg7[%c0_124, %c0_125, %c0_126], %437 {strides = array<i32>} : memref<1x16x128xf32, #tpu.memory_space<vmem>>, vector<1x16x128xf32>,
    return
  }
  func.func @transform_0(%arg0: i32) -> (i32, i32, i32) {
    %c0_i32 = arith.constant 0 : i32
    %c0_i32_0 = arith.constant 0 : i32
    %c0_i32_1 = arith.constant 0 : i32
    return %arg0, %c0_i32, %c0_i32_0 : i32, i32, i32
  }
  func.func @transform_1(%arg0: i32) -> (i32, i32, i32) {
    %c0_i32 = arith.constant 0 : i32
    %c0_i32_0 = arith.constant 0 : i32
    %c0_i32_1 = arith.constant 0 : i32
    %c0_i32_2 = arith.constant 0 : i32
    return %c0_i32, %c0_i32_0, %c0_i32_1 : i32, i32, i32
  }
  func.func @transform_2(%arg0: i32) -> (i32, i32, i32) {
    %c0_i32 = arith.constant 0 : i32
    %c0_i32_0 = arith.constant 0 : i32
    %c0_i32_1 = arith.constant 0 : i32
    %c0_i32_2 = arith.constant 0 : i32
    return %c0_i32, %c0_i32_0, %c0_i32_1 : i32, i32, i32
  }
  func.func @transform_3(%arg0: i32) -> (i32, i32) {
    %c0_i32 = arith.constant 0 : i32
    %c0_i32_0 = arith.constant 0 : i32
    %c0_i32_1 = arith.constant 0 : i32
    return %c0_i32, %c0_i32_0 : i32, i32
  }
  func.func @transform_4(%arg0: i32) -> (i32, i32) {
    %c0_i32 = arith.constant 0 : i32
    %c0_i32_0 = arith.constant 0 : i32
    %c0_i32_1 = arith.constant 0 : i32
    return %c0_i32, %c0_i32_0 : i32, i32
  }
  func.func @transform_5(%arg0: i32) -> (i32, i32) {
    %c0_i32 = arith.constant 0 : i32
    %c0_i32_0 = arith.constant 0 : i32
    %c0_i32_1 = arith.constant 0 : i32
    return %c0_i32, %c0_i32_0 : i32, i32
  }
  func.func @transform_6(%arg0: i32) -> (i32, i32, i32) {
    %c0_i32 = arith.constant 0 : i32
    %c0_i32_0 = arith.constant 0 : i32
    %c0_i32_1 = arith.constant 0 : i32
    return %arg0, %c0_i32, %c0_i32_0 : i32, i32, i32
  }
}

</mosaic_0001>

<llo_original>
// kernel: transpan_forward.1
$region0: #{transpan_forward.1}
  #allocation0 [shape = 'u32[]', space=smem, size = 0x4, offset = 0x4, fixed_abs, tag = 'smem constant byte address 0x4 - core index']
  #allocation1 [shape = 'u32[72,128]{1,0:T(1,128)}', space=vmem, size = 0x9000, scoped, tag = 'internal scratch']
  %s0 = inlined_call_operand.vmem [shape: f32[2,16,32], index: 0, kind: input, shape index: {}]
  %s1 = inlined_call_operand.vmem [shape: f32[2,32,288], index: 1, kind: input, shape index: {}]
  %s2 = inlined_call_operand.vmem [shape: f32[2,128,32], index: 2, kind: input, shape index: {}]
  %s3 = inlined_call_operand.vmem [shape: f32[32,128], index: 3, kind: input, shape index: {}]
  %s4 = inlined_call_operand.vmem [shape: f32[14,32], index: 4, kind: input, shape index: {}]
  %s5 = inlined_call_operand.vmem [shape: f32[3,128], index: 5, kind: input, shape index: {}]
  %s6 = inlined_call_operand.vmem [shape: f32[2,16,128], index: 6, kind: output, shape index: {}]
  %s7 = sld [smem:[#allocation0]]
  $region57: #{transpan_forward.1} parent=0
    _
  %s9 = ssub.s32 1, %s7
  %s10 = scalar_select 0, %s9, %s7
  loop: start=0, step=1, limit=4
  $region2: #{transpan_forward.1} parent=0 // loop_pre_header
    _
  $region3: #{transpan_forward.1} parent=0 // loop_header
    %s12 = sphi 0, %s16
    %p13 = scmp.ge.s32.totalorder %s12, 4
    %s22 = sphi 0, %s24
    %s25 = sphi 0, %s22
    %s26 = sphi 0, %s25
    %s42 = sphi 0, %s26
    %s46 = sphi 0, %s46
    %s48 = sphi 0, %s46
    %s49 = sphi 0, %s48
    %s63 = sphi 0, %s49
    %s67 = sphi 0, %s67
    %s69 = sphi 0, %s67
    %s70 = sphi 0, %s69
    %s84 = sphi 0, %s70
    %s88 = sphi 0, %s88
    %s90 = sphi 0, %s88
    %s91 = sphi 0, %s90
    %s105 = sphi 0, %s91
    %s109 = sphi 0, %s109
    %s111 = sphi 0, %s109
    %s112 = sphi 0, %s111
    %s126 = sphi 0, %s112
    %s130 = sphi 0, %s130
    %s132 = sphi 0, %s130
    %s133 = sphi 0, %s132
    %s147 = sphi 0, %s133
    %s153 = sphi 0, %s155
    %s156 = sphi 0, %s153
    %s157 = sphi 0, %s156
    %s173 = sphi 0, %s157
  $region4: #{transpan_forward.1} parent=0 // loop_header_branch
    %15 = sbr.rel (%p13) target = $region8
  $region5: #{transpan_forward.1} parent=0 // loop_body
    %s17 = ssub.s32 %s12, 1
    %s18 = ssub.s32 %s12, 2
    %s19 = sadd.s32 %s12, 1
    %s20 = ssub.s32 %s12, %s19
    %p21 = scmp.eq.s32.totalorder %s20, 0
    %s23 = sadd.s32 %s22, 1
    %s24 = scalar_select %p21, %s22, %s23
    %p27 = pneg %p21
    %p28 = scmp.eq.s32.totalorder %s12, 1
    %p29 = por %p27, %p28
    %p30 = scmp.ne.s32.totalorder %s22, %s25
    %p31 = scmp.eq.s32.totalorder %s12, 0
    %p32 = por %p30, %p31
    %p33 = scmp.ne.s32.totalorder %s22, %s25
    %p34 = scmp.eq.s32.totalorder %s17, 1
    %p35 = por %p33, %p34
    %p36 = scmp.ne.s32.totalorder %s25, %s26
    %p37 = scmp.eq.s32.totalorder %s17, 0
    %p38 = por %p36, %p37
    %p39 = scmp.ne.s32.totalorder %s25, %s26
    %p40 = scmp.eq.s32.totalorder %s18, 1
    %p41 = por %p39, %p40
    %p43 = scmp.ne.s32.totalorder %s26, %s42
    %p44 = scmp.eq.s32.totalorder %s18, 0
    %p45 = por %p43, %p44
    %s47 = sadd.s32 %s46, 1
    %p50 = scmp.eq.s32.totalorder %s12, 1
    %p51 = scmp.ne.s32.totalorder %s46, %s48
    %p52 = scmp.eq.s32.totalorder %s12, 0
    %p53 = por %p51, %p52
    %p54 = scmp.ne.s32.totalorder %s46, %s48
    %p55 = scmp.eq.s32.totalorder %s17, 1
    %p56 = por %p54, %p55
    %p57 = scmp.ne.s32.totalorder %s48, %s49
    %p58 = scmp.eq.s32.totalorder %s17, 0
    %p59 = por %p57, %p58
    %p60 = scmp.ne.s32.totalorder %s48, %s49
    %p61 = scmp.eq.s32.totalorder %s18, 1
    %p62 = por %p60, %p61
    %p64 = scmp.ne.s32.totalorder %s49, %s63
    %p65 = scmp.eq.s32.totalorder %s18, 0
    %p66 = por %p64, %p65
    %s68 = sadd.s32 %s67, 1
    %p71 = scmp.eq.s32.totalorder %s12, 1
    %p72 = scmp.ne.s32.totalorder %s67, %s69
    %p73 = scmp.eq.s32.totalorder %s12, 0
    %p74 = por %p72, %p73
    %p75 = scmp.ne.s32.totalorder %s67, %s69
    %p76 = scmp.eq.s32.totalorder %s17, 1
    %p77 = por %p75, %p76
    %p78 = scmp.ne.s32.totalorder %s69, %s70
    %p79 = scmp.eq.s32.totalorder %s17, 0
    %p80 = por %p78, %p79
    %p81 = scmp.ne.s32.totalorder %s69, %s70
    %p82 = scmp.eq.s32.totalorder %s18, 1
    %p83 = por %p81, %p82
    %p85 = scmp.ne.s32.totalorder %s70, %s84
    %p86 = scmp.eq.s32.totalorder %s18, 0
    %p87 = por %p85, %p86
    %s89 = sadd.s32 %s88, 1
    %p92 = scmp.eq.s32.totalorder %s12, 1
    %p93 = scmp.ne.s32.totalorder %s88, %s90
    %p94 = scmp.eq.s32.totalorder %s12, 0
    %p95 = por %p93, %p94
    %p96 = scmp.ne.s32.totalorder %s88, %s90
    %p97 = scmp.eq.s32.totalorder %s17, 1
    %p98 = por %p96, %p97
    %p99 = scmp.ne.s32.totalorder %s90, %s91
    %p100 = scmp.eq.s32.totalorder %s17, 0
    %p101 = por %p99, %p100
    %p102 = scmp.ne.s32.totalorder %s90, %s91
    %p103 = scmp.eq.s32.totalorder %s18, 1
    %p104 = por %p102, %p103
    %p106 = scmp.ne.s32.totalorder %s91, %s105
    %p107 = scmp.eq.s32.totalorder %s18, 0
    %p108 = por %p106, %p107
    %s110 = sadd.s32 %s109, 1
    %p113 = scmp.eq.s32.totalorder %s12, 1
    %p114 = scmp.ne.s32.totalorder %s109, %s111
    %p115 = scmp.eq.s32.totalorder %s12, 0
    %p116 = por %p114, %p115
    %p117 = scmp.ne.s32.totalorder %s109, %s111
    %p118 = scmp.eq.s32.totalorder %s17, 1
    %p119 = por %p117, %p118
    %p120 = scmp.ne.s32.totalorder %s111, %s112
    %p121 = scmp.eq.s32.totalorder %s17, 0
    %p122 = por %p120, %p121
    %p123 = scmp.ne.s32.totalorder %s111, %s112
    %p124 = scmp.eq.s32.totalorder %s18, 1
    %p125 = por %p123, %p124
    %p127 = scmp.ne.s32.totalorder %s112, %s126
    %p128 = scmp.eq.s32.totalorder %s18, 0
    %p129 = por %p127, %p128
    %s131 = sadd.s32 %s130, 1
    %p134 = scmp.eq.s32.totalorder %s12, 1
    %p135 = scmp.ne.s32.totalorder %s130, %s132
    %p136 = scmp.eq.s32.totalorder %s12, 0
    %p137 = por %p135, %p136
    %p138 = scmp.ne.s32.totalorder %s130, %s132
    %p139 = scmp.eq.s32.totalorder %s17, 1
    %p140 = por %p138, %p139
    %p141 = scmp.ne.s32.totalorder %s132, %s133
    %p142 = scmp.eq.s32.totalorder %s17, 0
    %p143 = por %p141, %p142
    %p144 = scmp.ne.s32.totalorder %s132, %s133
    %p145 = scmp.eq.s32.totalorder %s18, 1
    %p146 = por %p144, %p145
    %p148 = scmp.ne.s32.totalorder %s133, %s147
    %p149 = scmp.eq.s32.totalorder %s18, 0
    %p150 = por %p148, %p149
    %s151 = ssub.s32 %s12, %s19
    %p152 = scmp.eq.s32.totalorder %s151, 0
    %s154 = sadd.s32 %s153, 1
    %s155 = scalar_select %p152, %s153, %s154
    %p158 = pneg %p152
    %p159 = scmp.eq.s32.totalorder %s12, 1
    %p160 = por %p158, %p159
    %p161 = scmp.ne.s32.totalorder %s153, %s156
    %p162 = scmp.eq.s32.totalorder %s12, 0
    %p163 = por %p161, %p162
    %p164 = scmp.ne.s32.totalorder %s153, %s156
    %p165 = scmp.eq.s32.totalorder %s17, 1
    %p166 = por %p164, %p165
    %p167 = scmp.ne.s32.totalorder %s156, %s157
    %p168 = scmp.eq.s32.totalorder %s17, 0
    %p169 = por %p167, %p168
    %p170 = scmp.ne.s32.totalorder %s156, %s157
    %p171 = scmp.eq.s32.totalorder %s18, 1
    %p172 = por %p170, %p171
    %p174 = scmp.ne.s32.totalorder %s157, %s173
    %p175 = scmp.eq.s32.totalorder %s18, 0
    %p176 = por %p174, %p175
    %p177 = scmp.le.s32.totalorder 1, %s12
    %p178 = scmp.lt.s32.totalorder %s12, 3
    %p179 = pnand %p177, %p178
    %p180 = pneg %p179
    // Predicated region
    $region9: #{transpan_forward.1} parent=5 // pred_check
      _
    $region10: #{transpan_forward.1} parent=5 // pred_check_branch
      %182 = sbr.rel (%p179) target = $region12
    $region11: #{transpan_forward.1} parent=5 // pred_region
      %s183 = ssub.s32 %s12, 1
      // Predicated region
      $region13: #{transpan_forward.1} parent=11 // pred_check
        %p184 = pneg %p59
      $region14: #{transpan_forward.1} parent=11 // pred_check_branch
        %186 = sbr.rel (%p184) target = $region16
      $region15: #{transpan_forward.1} parent=11 // pred_region
        _
      $region16: #{transpan_forward.1} parent=11 // pred_fallthru
        _
      // Predicated region
      $region17: #{transpan_forward.1} parent=11 // pred_check
        %p187 = pneg %p80
      $region18: #{transpan_forward.1} parent=11 // pred_check_branch
        %189 = sbr.rel (%p187) target = $region20
      $region19: #{transpan_forward.1} parent=11 // pred_region
        _
      $region20: #{transpan_forward.1} parent=11 // pred_fallthru
        _
      // Predicated region
      $region21: #{transpan_forward.1} parent=11 // pred_check
        %p190 = pneg %p101
      $region22: #{transpan_forward.1} parent=11 // pred_check_branch
        %192 = sbr.rel (%p190) target = $region24
      $region23: #{transpan_forward.1} parent=11 // pred_region
        _
      $region24: #{transpan_forward.1} parent=11 // pred_fallthru
        _
      // Predicated region
      $region25: #{transpan_forward.1} parent=11 // pred_check
        %p193 = pneg %p122
      $region26: #{transpan_forward.1} parent=11 // pred_check_branch
        %195 = sbr.rel (%p193) target = $region28
      $region27: #{transpan_forward.1} parent=11 // pred_region
        _
      $region28: #{transpan_forward.1} parent=11 // pred_fallthru
        _
      // Predicated region
      $region29: #{transpan_forward.1} parent=11 // pred_check
        %p196 = pneg %p143
      $region30: #{transpan_forward.1} parent=11 // pred_check_branch
        %198 = sbr.rel (%p196) target = $region32
      $region31: #{transpan_forward.1} parent=11 // pred_region
        _
      $region32: #{transpan_forward.1} parent=11 // pred_fallthru
        _
    $region12: #{transpan_forward.1} parent=5 // pred_fallthru
      _
    %p199 = scmp.lt.s32.totalorder %s12, 2
    // Predicated region
    $region33: #{transpan_forward.1} parent=5 // pred_check
      %p200 = pneg %p199
    $region34: #{transpan_forward.1} parent=5 // pred_check_branch
      %202 = sbr.rel (%p200) target = $region36
    $region35: #{transpan_forward.1} parent=5 // pred_region
      // Predicated region
      $region37: #{transpan_forward.1} parent=35 // pred_check
        %p203 = pneg %p32
      $region38: #{transpan_forward.1} parent=35 // pred_check_branch
        %205 = sbr.rel (%p203) target = $region40
      $region39: #{transpan_forward.1} parent=35 // pred_region
        %p206 = scmp.lt.s32.totalorder %s12, 1
        %s207 = scalar_select %p206, %s12, 1
        %s208 = smul.addr %s207, 2
        %s209 = smul.addr %s208, 8
        %s210 = scalar_lea.vmem %s0, %s209
      $region40: #{transpan_forward.1} parent=35 // pred_fallthru
        _
    $region36: #{transpan_forward.1} parent=5 // pred_fallthru
      _
    %p211 = scmp.le.s32.totalorder 1, %s12
    %p212 = scmp.lt.s32.totalorder %s12, 3
    %p213 = pnand %p211, %p212
    %p214 = pneg %p213
    // Predicated region
    $region41: #{transpan_forward.1} parent=5 // pred_check
      _
    $region42: #{transpan_forward.1} parent=5 // pred_check_branch
      %216 = sbr.rel (%p213) target = $region44
    $region43: #{transpan_forward.1} parent=5 // pred_region
      %s217 = ssub.s32 %s12, 1
      %p218 = scmp.lt.s32.totalorder %s17, 1
      %s219 = scalar_select %p218, %s17, 1
      %s220 = smul.addr %s219, 2
      %s221 = smul.addr %s220, 8
      %s222 = scalar_lea.vmem %s0, %s221
      %p223 = pneg %p38
      %p224 = pneg %p35
      %p225 = pneg %p59
      %p226 = pneg %p56
      %p227 = pneg %p80
      %p228 = pneg %p77
      %p229 = pneg %p101
      %p230 = pneg %p98
      %p231 = pneg %p122
      %p232 = pneg %p119
      %p233 = pneg %p143
      %p234 = pneg %p140
      %p235 = pneg %p169
      %p236 = pneg %p166
      %p237 = scmp.lt.s32.totalorder %s17, 1
      %s238 = scalar_select %p237, %s17, 1
      %s239 = smul.addr %s238, 2
      %s240 = smul.addr %s239, 8
      %s241 = scalar_lea.vmem %s6, %s240
      %p242 = scmp.lt.s32.totalorder %s17, 1
      %s243 = scalar_select %p242, %s17, 1
      %s244 = smul.addr %s243, 2
      %s245 = smul.addr %s244, 8
      %s246 = scalar_lea.vmem %s0, %s245
      %p247 = scmp.lt.s32.totalorder %s17, 1
      %s248 = scalar_select %p247, %s17, 1
      %s249 = smul.addr %s248, 2
      %s250 = smul.addr %s249, 8
      %s251 = scalar_lea.vmem %s6, %s250
      %v252 = vld [vmem:[%s4] sm:$0xff]
      %v253 = vld [vmem:[%s4 + $0x8] sm:$0x3f]
      %v254 = vld [vmem:[%s5] sm:$0x7]
      %v255 = vld [vmem:[%s246] sm:$0xff]
      %v256 = vld [vmem:[%s246 + $0x8] sm:$0xff]
      %v257 = vld [vmem:[%s1] sm:$0xff]
      %v258 = vld [vmem:[%s1 + $0x8] sm:$0xff]
      %v259 = vld [vmem:[%s1 + $0x10] sm:$0xff]
      %v260 = vld [vmem:[%s1 + $0x18] sm:$0xff]
      %v261 = vld [vmem:[%s1 + $0x20] sm:$0xff]
      %v262 = vld [vmem:[%s1 + $0x28] sm:$0xff]
      %v263 = vld [vmem:[%s1 + $0x30] sm:$0xff]
      %v264 = vld [vmem:[%s1 + $0x38] sm:$0xff]
      %v265 = vld [vmem:[%s1 + $0x40] sm:$0xff]
      %v266 = vld [vmem:[%s1 + $0x48] sm:$0xff]
      %v267 = vld [vmem:[%s1 + $0x50] sm:$0xff]
      %v268 = vld [vmem:[%s1 + $0x58] sm:$0xff]
      %v269 = vld [vmem:[%s2] sm:$0xff]
      %v270 = vld [vmem:[%s2 + $0x8] sm:$0xff]
      %v271 = vld [vmem:[%s2 + $0x10] sm:$0xff]
      %v272 = vld [vmem:[%s2 + $0x18] sm:$0xff]
      %v273 = vld [vmem:[%s2 + $0x20] sm:$0xff]
      %v274 = vld [vmem:[%s2 + $0x28] sm:$0xff]
      %v275 = vld [vmem:[%s2 + $0x30] sm:$0xff]
      %v276 = vld [vmem:[%s2 + $0x38] sm:$0xff]
      %v277 = vld [vmem:[%s2 + $0x40] sm:$0xff]
      %v278 = vld [vmem:[%s2 + $0x48] sm:$0xff]
      %v279 = vld [vmem:[%s2 + $0x50] sm:$0xff]
      %v280 = vld [vmem:[%s2 + $0x58] sm:$0xff]
      %v281 = vld [vmem:[%s2 + $0x60] sm:$0xff]
      %v282 = vld [vmem:[%s2 + $0x68] sm:$0xff]
      %v283 = vld [vmem:[%s2 + $0x70] sm:$0xff]
      %v284 = vld [vmem:[%s2 + $0x78] sm:$0xff]
      %vm285 = vcmask 261120
      %v286 = vsel %vm285, %v255, 0.0
      %287 = vadd.xlane.f32.xlu0 %v286
      %v288 = vpop.xlane.xlu0 %287
      %v289 = vsel %vm285, %v256, 0.0
      %290 = vadd.xlane.f32.xlu0 %v289
      %v291 = vpop.xlane.xlu0 %290
      %v292 = vrcp.pop 32.0
      %v293 = vmul.f32 32.0, %v292
      %v294 = vsub.f32 1.0, %v293
      %v295 = vmul.f32 %v292, %v294
      %v296 = vadd.f32 %v292, %v295
      %vm297 = vweird.f32 %v292
      %v298 = vsel %vm297, %v292, %v296
      %v299 = vmul.f32 %v288, %v298
      %v300 = vmul.f32 %v291, %v298
      %v301 = vsub.f32 %v255, %v299
      %v302 = vsub.f32 %v256, %v300
      %v303 = vmul.f32 %v301, %v301
      %v304 = vmul.f32 %v302, %v302
      %v305 = vsel %vm285, %v303, 0.0
      %306 = vadd.xlane.f32.xlu0 %v305
      %v307 = vpop.xlane.xlu0 %306
      %v308 = vsel %vm285, %v304, 0.0
      %309 = vadd.xlane.f32.xlu0 %v308
      %v310 = vpop.xlane.xlu0 %309
      %v311 = vmul.f32 %v307, %v298
      %v312 = vmul.f32 %v310, %v298
      %v313 = vadd.f32 %v311, 1e-05
      %v314 = vadd.f32 %v312, 1e-05
      %v315 = vrsqrt.pop %v313
      %v316 = vmul.f32 %v315, %v313
      %v317 = vmul.f32 %v316, %v315
      %v318 = vmul.f32 0.5, %v317
      %v319 = vsub.f32 1.5, %v318
      %v320 = vmul.f32 %v315, %v319
      %vm321 = vweird.f32 %v313
      %vm322 = vweird.f32 %v315
      %vm323 = vmor %vm321, %vm322
      %v324 = vsel %vm323, %v315, %v320
      %v325 = vrsqrt.pop %v314
      %v326 = vmul.f32 %v325, %v314
      %v327 = vmul.f32 %v326, %v325
      %v328 = vmul.f32 0.5, %v327
      %v329 = vsub.f32 1.5, %v328
      %v330 = vmul.f32 %v325, %v329
      %vm331 = vweird.f32 %v314
      %vm332 = vweird.f32 %v325
      %vm333 = vmor %vm331, %vm332
      %v334 = vsel %vm333, %v325, %v330
      %v335 = vmul.f32 %v301, %v324
      %v336 = vmul.f32 %v302, %v334
      %v337 = vperm.slane %v252, 0
      %v338 = vmul.f32 %v335, %v337
      %v339 = vmul.f32 %v336, %v337
      %v340 = vperm.slane %v252, 1
      %v341 = vadd.f32 %v338, %v340
      %v342 = vadd.f32 %v339, %v340
      %v344 = vsel %vm285, %v341, 0
      %v347 = vsel %vm285, %v342, 0
      %349 = vmatpush.msra.mxu0 0.0
      %350 = vmatpush.msra.mxu0 0.0
      %351 = vmatpush.msra.mxu0 0.0
      %352 = vmatpush.msra.mxu0 0.0
      %353 = vmatpush.msra.mxu0 0.0
      %354 = vmatpush.msra.mxu0 0.0
      %355 = vmatpush.msra.mxu0 0.0
      %356 = vmatpush.msra.mxu0 0.0
      %357 = vmatpush.msra.mxu0 0.0
      %358 = vmatpush.msra.mxu0 0.0
      %359 = vmatpush.msra.mxu0 0.0
      %360 = vmatpush.msra.mxu0 0.0
      %361 = vmatpush.msra.mxu0 %v266
      %362 = vmatpush.msra.mxu0 %v263
      %363 = vmatpush.msra.mxu0 %v260
      %364 = vmatpush.msra.mxu0 %v257
      %365 = vmatmul.f32.gmra.mxu0 %v344
      %v366 = vpop.f32.mrf.mxu0
      %v367 = vadd.f32 0.0, %v366
      %368 = vmatmul.f32.gmra.mxu0 %v347
      %v369 = vpop.f32.mrf.mxu0
      %v370 = vadd.f32 0.0, %v369
      %371 = vdwg.mxu0
      %374 = vrot.lane.b32.xlu0 %v367, 96
      %v375 = vpop.permute.xlu0 %374
      %376 = vrot.lane.b32.xlu0 %v370, 96
      %v377 = vpop.permute.xlu0 %376
      %vm378 = vcmask 64512
      %v379 = vsel %vm378, %v367, 0
      %v381 = vsel %vm378, %v370, 0
      %v383 = vsel %vm378, %v375, 0
      %v385 = vsel %vm378, %v377, 0
      %387 = vmatpush.xpose.msra.mxu0 0.0
      %388 = vmatpush.xpose.msra.mxu0 0.0
      %389 = vmatpush.xpose.msra.mxu0 0.0
      %390 = vmatpush.xpose.msra.mxu0 0.0
      %391 = vmatpush.xpose.msra.mxu0 0.0
      %392 = vmatpush.xpose.msra.mxu0 0.0
      %393 = vmatpush.xpose.msra.mxu0 0.0
      %394 = vmatpush.xpose.msra.mxu0 0.0
      %395 = vmatpush.xpose.msra.mxu0 0.0
      %396 = vmatpush.xpose.msra.mxu0 0.0
      %397 = vmatpush.xpose.msra.mxu0 0.0
      %398 = vmatpush.xpose.msra.mxu0 0.0
      %399 = vmatpush.xpose.msra.mxu0 0.0
      %400 = vmatpush.xpose.msra.mxu0 0.0
      %401 = vmatpush.xpose.msra.mxu0 %v385
      %402 = vmatpush.xpose.msra.mxu0 %v383
      %403 = vmatmul.f32.gmra.mxu0 %v379
      %v404 = vpop.f32.mrf.mxu0
      %v405 = vadd.f32 0.0, %v404
      %406 = vmatmul.f32.gmra.mxu0 %v381
      %v407 = vpop.f32.mrf.mxu0
      %v408 = vadd.f32 0.0, %v407
      %409 = vdwg.mxu0
      %vm410 = vcmask 130048
      %v411 = vsel %vm410, %v405, -inf
      %412 = vmax.xlane.f32.xlu0 %v411
      %v413 = vpop.xlane.xlu0 %412
      %v414 = vsel %vm410, %v408, -inf
      %415 = vmax.xlane.f32.xlu0 %v414
      %v416 = vpop.xlane.xlu0 %415
      %v417 = vsub.f32 %v405, %v413
      %v418 = vsub.f32 %v408, %v416
      %v419 = vmul.f32 %v417, 1.442695
      %v420 = vpow.pop %v419
      %v421 = vmul.f32 %v418, 1.442695
      %v422 = vpow.pop %v421
      %v423 = vsel %vm410, %v420, 0.0
      %424 = vadd.xlane.f32.xlu0 %v423
      %v425 = vpop.xlane.xlu0 %424
      %v426 = vsel %vm410, %v422, 0.0
      %427 = vadd.xlane.f32.xlu0 %v426
      %v428 = vpop.xlane.xlu0 %427
      %v429 = vrcp.pop %v425
      %v430 = vrcp.pop %v428
      %v431 = vmul.f32 %v425, %v429
      %v432 = vmul.f32 %v428, %v430
      %v433 = vsub.f32 2.0, %v431
      %v434 = vsub.f32 2.0, %v432
      %v435 = vmul.f32 %v429, %v433
      %v436 = vmul.f32 %v430, %v434
      %v437 = vmul.f32 %v420, %v435
      %v438 = vmul.f32 %v422, %v436
      %439 = vrot.lane.b32.xlu0 %v367, 64
      %v440 = vpop.permute.xlu0 %439
      %441 = vrot.lane.b32.xlu0 %v370, 64
      %v442 = vpop.permute.xlu0 %441
      %v446 = vsel %vm410, %v437, 0
      %v449 = vsel %vm410, %v438, 0
      %451 = vmatpush.msra.mxu0 0.0
      %452 = vmatpush.msra.mxu0 0.0
      %453 = vmatpush.msra.mxu0 0.0
      %454 = vmatpush.msra.mxu0 0.0
      %455 = vmatpush.msra.mxu0 0.0
      %456 = vmatpush.msra.mxu0 0.0
      %457 = vmatpush.msra.mxu0 0.0
      %458 = vmatpush.msra.mxu0 0.0
      %459 = vmatpush.msra.mxu0 0.0
      %460 = vmatpush.msra.mxu0 0.0
      %461 = vmatpush.msra.mxu0 0.0
      %462 = vmatpush.msra.mxu0 0.0
      %463 = vmatpush.msra.mxu0 0.0
      %464 = vmatpush.msra.mxu0 0.0
      %465 = vmatpush.msra.mxu0 %v442
      %466 = vmatpush.msra.mxu0 %v440
      %467 = vmatmul.f32.gmra.mxu0 %v446
      %v468 = vpop.f32.mrf.mxu0
      %v469 = vadd.f32 0.0, %v468
      %470 = vmatmul.f32.gmra.mxu0 %v449
      %v471 = vpop.f32.mrf.mxu0
      %v472 = vadd.f32 0.0, %v471
      %473 = vdwg.mxu0
      %474 = vrot.lane.b32.xlu0 %v367, 120
      %v475 = vpop.permute.xlu0 %474
      %476 = vrot.lane.b32.xlu0 %v370, 120
      %v477 = vpop.permute.xlu0 %476
      %478 = vrot.lane.b32.xlu0 %v367, 88
      %v479 = vpop.permute.xlu0 %478
      %480 = vrot.lane.b32.xlu0 %v370, 88
      %v481 = vpop.permute.xlu0 %480
      %v482 = vsel %vm378, %v475, 0
      %v484 = vsel %vm378, %v477, 0
      %v486 = vsel %vm378, %v479, 0
      %v488 = vsel %vm378, %v481, 0
      %490 = vmatpush.xpose.msra.mxu0 0.0
      %491 = vmatpush.xpose.msra.mxu0 0.0
      %492 = vmatpush.xpose.msra.mxu0 0.0
      %493 = vmatpush.xpose.msra.mxu0 0.0
      %494 = vmatpush.xpose.msra.mxu0 0.0
      %495 = vmatpush.xpose.msra.mxu0 0.0
      %496 = vmatpush.xpose.msra.mxu0 0.0
      %497 = vmatpush.xpose.msra.mxu0 0.0
      %498 = vmatpush.xpose.msra.mxu0 0.0
      %499 = vmatpush.xpose.msra.mxu0 0.0
      %500 = vmatpush.xpose.msra.mxu0 0.0
      %501 = vmatpush.xpose.msra.mxu0 0.0
      %502 = vmatpush.xpose.msra.mxu0 0.0
      %503 = vmatpush.xpose.msra.mxu0 0.0
      %504 = vmatpush.xpose.msra.mxu0 %v488
      %505 = vmatpush.xpose.msra.mxu0 %v486
      %506 = vmatmul.f32.gmra.mxu0 %v482
      %v507 = vpop.f32.mrf.mxu0
      %v508 = vadd.f32 0.0, %v507
      %509 = vmatmul.f32.gmra.mxu0 %v484
      %v510 = vpop.f32.mrf.mxu0
      %v511 = vadd.f32 0.0, %v510
      %512 = vdwg.mxu0
      %v513 = vsel %vm410, %v508, -inf
      %514 = vmax.xlane.f32.xlu0 %v513
      %v515 = vpop.xlane.xlu0 %514
      %v516 = vsel %vm410, %v511, -inf
      %517 = vmax.xlane.f32.xlu0 %v516
      %v518 = vpop.xlane.xlu0 %517
      %v519 = vsub.f32 %v508, %v515
      %v520 = vsub.f32 %v511, %v518
      %v521 = vmul.f32 %v519, 1.442695
      %v522 = vpow.pop %v521
      %v523 = vmul.f32 %v520, 1.442695
      %v524 = vpow.pop %v523
      %v525 = vsel %vm410, %v522, 0.0
      %526 = vadd.xlane.f32.xlu0 %v525
      %v527 = vpop.xlane.xlu0 %526
      %v528 = vsel %vm410, %v524, 0.0
      %529 = vadd.xlane.f32.xlu0 %v528
      %v530 = vpop.xlane.xlu0 %529
      %v531 = vrcp.pop %v527
      %v532 = vrcp.pop %v530
      %v533 = vmul.f32 %v527, %v531
      %v534 = vmul.f32 %v530, %v532
      %v535 = vsub.f32 2.0, %v533
      %v536 = vsub.f32 2.0, %v534
      %v537 = vmul.f32 %v531, %v535
      %v538 = vmul.f32 %v532, %v536
      %v539 = vmul.f32 %v522, %v537
      %v540 = vmul.f32 %v524, %v538
      %541 = vrot.lane.b32.xlu0 %v367, 56
      %v542 = vpop.permute.xlu0 %541
      %543 = vrot.lane.b32.xlu0 %v370, 56
      %v544 = vpop.permute.xlu0 %543
      %v548 = vsel %vm410, %v539, 0
      %v551 = vsel %vm410, %v540, 0
      %553 = vmatpush.msra.mxu0 0.0
      %554 = vmatpush.msra.mxu0 0.0
      %555 = vmatpush.msra.mxu0 0.0
      %556 = vmatpush.msra.mxu0 0.0
      %557 = vmatpush.msra.mxu0 0.0
      %558 = vmatpush.msra.mxu0 0.0
      %559 = vmatpush.msra.mxu0 0.0
      %560 = vmatpush.msra.mxu0 0.0
      %561 = vmatpush.msra.mxu0 0.0
      %562 = vmatpush.msra.mxu0 0.0
      %563 = vmatpush.msra.mxu0 0.0
      %564 = vmatpush.msra.mxu0 0.0
      %565 = vmatpush.msra.mxu0 0.0
      %566 = vmatpush.msra.mxu0 0.0
      %567 = vmatpush.msra.mxu0 %v544
      %568 = vmatpush.msra.mxu0 %v542
      %569 = vmatmul.f32.gmra.mxu0 %v548
      %v570 = vpop.f32.mrf.mxu0
      %v571 = vadd.f32 0.0, %v570
      %572 = vmatmul.f32.gmra.mxu0 %v551
      %v573 = vpop.f32.mrf.mxu0
      %v574 = vadd.f32 0.0, %v573
      %575 = vdwg.mxu0
      %576 = vrot.lane.b32.xlu0 %v367, 112
      %v577 = vpop.permute.xlu0 %576
      %578 = vrot.lane.b32.xlu0 %v370, 112
      %v579 = vpop.permute.xlu0 %578
      %580 = vrot.lane.b32.xlu0 %v367, 80
      %v581 = vpop.permute.xlu0 %580
      %582 = vrot.lane.b32.xlu0 %v370, 80
      %v583 = vpop.permute.xlu0 %582
      %v584 = vsel %vm378, %v577, 0
      %v586 = vsel %vm378, %v579, 0
      %v588 = vsel %vm378, %v581, 0
      %v590 = vsel %vm378, %v583, 0
      %592 = vmatpush.xpose.msra.mxu0 0.0
      %593 = vmatpush.xpose.msra.mxu0 0.0
      %594 = vmatpush.xpose.msra.mxu0 0.0
      %595 = vmatpush.xpose.msra.mxu0 0.0
      %596 = vmatpush.xpose.msra.mxu0 0.0
      %597 = vmatpush.xpose.msra.mxu0 0.0
      %598 = vmatpush.xpose.msra.mxu0 0.0
      %599 = vmatpush.xpose.msra.mxu0 0.0
      %600 = vmatpush.xpose.msra.mxu0 0.0
      %601 = vmatpush.xpose.msra.mxu0 0.0
      %602 = vmatpush.xpose.msra.mxu0 0.0
      %603 = vmatpush.xpose.msra.mxu0 0.0
      %604 = vmatpush.xpose.msra.mxu0 0.0
      %605 = vmatpush.xpose.msra.mxu0 0.0
      %606 = vmatpush.xpose.msra.mxu0 %v590
      %607 = vmatpush.xpose.msra.mxu0 %v588
      %608 = vmatmul.f32.gmra.mxu0 %v584
      %v609 = vpop.f32.mrf.mxu0
      %v610 = vadd.f32 0.0, %v609
      %611 = vmatmul.f32.gmra.mxu0 %v586
      %v612 = vpop.f32.mrf.mxu0
      %v613 = vadd.f32 0.0, %v612
      %614 = vdwg.mxu0
      %v615 = vsel %vm410, %v610, -inf
      %616 = vmax.xlane.f32.xlu0 %v615
      %v617 = vpop.xlane.xlu0 %616
      %v618 = vsel %vm410, %v613, -inf
      %619 = vmax.xlane.f32.xlu0 %v618
      %v620 = vpop.xlane.xlu0 %619
      %v621 = vsub.f32 %v610, %v617
      %v622 = vsub.f32 %v613, %v620
      %v623 = vmul.f32 %v621, 1.442695
      %v624 = vpow.pop %v623
      %v625 = vmul.f32 %v622, 1.442695
      %v626 = vpow.pop %v625
      %v627 = vsel %vm410, %v624, 0.0
      %628 = vadd.xlane.f32.xlu0 %v627
      %v629 = vpop.xlane.xlu0 %628
      %v630 = vsel %vm410, %v626, 0.0
      %631 = vadd.xlane.f32.xlu0 %v630
      %v632 = vpop.xlane.xlu0 %631
      %v633 = vrcp.pop %v629
      %v634 = vrcp.pop %v632
      %v635 = vmul.f32 %v629, %v633
      %v636 = vmul.f32 %v632, %v634
      %v637 = vsub.f32 2.0, %v635
      %v638 = vsub.f32 2.0, %v636
      %v639 = vmul.f32 %v633, %v637
      %v640 = vmul.f32 %v634, %v638
      %v641 = vmul.f32 %v624, %v639
      %v642 = vmul.f32 %v626, %v640
      %643 = vrot.lane.b32.xlu0 %v367, 48
      %v644 = vpop.permute.xlu0 %643
      %645 = vrot.lane.b32.xlu0 %v370, 48
      %v646 = vpop.permute.xlu0 %645
      %v650 = vsel %vm410, %v641, 0
      %v653 = vsel %vm410, %v642, 0
      %655 = vmatpush.msra.mxu0 0.0
      %656 = vmatpush.msra.mxu0 0.0
      %657 = vmatpush.msra.mxu0 0.0
      %658 = vmatpush.msra.mxu0 0.0
      %659 = vmatpush.msra.mxu0 0.0
      %660 = vmatpush.msra.mxu0 0.0
      %661 = vmatpush.msra.mxu0 0.0
      %662 = vmatpush.msra.mxu0 0.0
      %663 = vmatpush.msra.mxu0 0.0
      %664 = vmatpush.msra.mxu0 0.0
      %665 = vmatpush.msra.mxu0 0.0
      %666 = vmatpush.msra.mxu0 0.0
      %667 = vmatpush.msra.mxu0 0.0
      %668 = vmatpush.msra.mxu0 0.0
      %669 = vmatpush.msra.mxu0 %v646
      %670 = vmatpush.msra.mxu0 %v644
      %671 = vmatmul.f32.gmra.mxu0 %v650
      %v672 = vpop.f32.mrf.mxu0
      %v673 = vadd.f32 0.0, %v672
      %674 = vmatmul.f32.gmra.mxu0 %v653
      %v675 = vpop.f32.mrf.mxu0
      %v676 = vadd.f32 0.0, %v675
      %677 = vdwg.mxu0
      %678 = vrot.lane.b32.xlu0 %v367, 104
      %v679 = vpop.permute.xlu0 %678
      %680 = vrot.lane.b32.xlu0 %v370, 104
      %v681 = vpop.permute.xlu0 %680
      %682 = vrot.lane.b32.xlu0 %v367, 72
      %v683 = vpop.permute.xlu0 %682
      %684 = vrot.lane.b32.xlu0 %v370, 72
      %v685 = vpop.permute.xlu0 %684
      %v686 = vsel %vm378, %v679, 0
      %v688 = vsel %vm378, %v681, 0
      %v690 = vsel %vm378, %v683, 0
      %v692 = vsel %vm378, %v685, 0
      %694 = vmatpush.xpose.msra.mxu0 0.0
      %695 = vmatpush.xpose.msra.mxu0 0.0
      %696 = vmatpush.xpose.msra.mxu0 0.0
      %697 = vmatpush.xpose.msra.mxu0 0.0
      %698 = vmatpush.xpose.msra.mxu0 0.0
      %699 = vmatpush.xpose.msra.mxu0 0.0
      %700 = vmatpush.xpose.msra.mxu0 0.0
      %701 = vmatpush.xpose.msra.mxu0 0.0
      %702 = vmatpush.xpose.msra.mxu0 0.0
      %703 = vmatpush.xpose.msra.mxu0 0.0
      %704 = vmatpush.xpose.msra.mxu0 0.0
      %705 = vmatpush.xpose.msra.mxu0 0.0
      %706 = vmatpush.xpose.msra.mxu0 0.0
      %707 = vmatpush.xpose.msra.mxu0 0.0
      %708 = vmatpush.xpose.msra.mxu0 %v692
      %709 = vmatpush.xpose.msra.mxu0 %v690
      %710 = vmatmul.f32.gmra.mxu0 %v686
      %v711 = vpop.f32.mrf.mxu0
      %v712 = vadd.f32 0.0, %v711
      %713 = vmatmul.f32.gmra.mxu0 %v688
      %v714 = vpop.f32.mrf.mxu0
      %v715 = vadd.f32 0.0, %v714
      %716 = vdwg.mxu0
      %v717 = vsel %vm410, %v712, -inf
      %718 = vmax.xlane.f32.xlu0 %v717
      %v719 = vpop.xlane.xlu0 %718
      %v720 = vsel %vm410, %v715, -inf
      %721 = vmax.xlane.f32.xlu0 %v720
      %v722 = vpop.xlane.xlu0 %721
      %v723 = vsub.f32 %v712, %v719
      %v724 = vsub.f32 %v715, %v722
      %v725 = vmul.f32 %v723, 1.442695
      %v726 = vpow.pop %v725
      %v727 = vmul.f32 %v724, 1.442695
      %v728 = vpow.pop %v727
      %v729 = vsel %vm410, %v726, 0.0
      %730 = vadd.xlane.f32.xlu0 %v729
      %v731 = vpop.xlane.xlu0 %730
      %v732 = vsel %vm410, %v728, 0.0
      %733 = vadd.xlane.f32.xlu0 %v732
      %v734 = vpop.xlane.xlu0 %733
      %v735 = vrcp.pop %v731
      %v736 = vrcp.pop %v734
      %v737 = vmul.f32 %v731, %v735
      %v738 = vmul.f32 %v734, %v736
      %v739 = vsub.f32 2.0, %v737
      %v740 = vsub.f32 2.0, %v738
      %v741 = vmul.f32 %v735, %v739
      %v742 = vmul.f32 %v736, %v740
      %v743 = vmul.f32 %v726, %v741
      %v744 = vmul.f32 %v728, %v742
      %745 = vrot.lane.b32.xlu0 %v367, 40
      %v746 = vpop.permute.xlu0 %745
      %747 = vrot.lane.b32.xlu0 %v370, 40
      %v748 = vpop.permute.xlu0 %747
      %v752 = vsel %vm410, %v743, 0
      %v755 = vsel %vm410, %v744, 0
      %757 = vmatpush.msra.mxu0 0.0
      %758 = vmatpush.msra.mxu0 0.0
      %759 = vmatpush.msra.mxu0 0.0
      %760 = vmatpush.msra.mxu0 0.0
      %761 = vmatpush.msra.mxu0 0.0
      %762 = vmatpush.msra.mxu0 0.0
      %763 = vmatpush.msra.mxu0 0.0
      %764 = vmatpush.msra.mxu0 0.0
      %765 = vmatpush.msra.mxu0 0.0
      %766 = vmatpush.msra.mxu0 0.0
      %767 = vmatpush.msra.mxu0 0.0
      %768 = vmatpush.msra.mxu0 0.0
      %769 = vmatpush.msra.mxu0 0.0
      %770 = vmatpush.msra.mxu0 0.0
      %771 = vmatpush.msra.mxu0 %v748
      %772 = vmatpush.msra.mxu0 %v746
      %773 = vmatmul.f32.gmra.mxu0 %v752
      %v774 = vpop.f32.mrf.mxu0
      %v775 = vadd.f32 0.0, %v774
      %776 = vmatmul.f32.gmra.mxu0 %v755
      %v777 = vpop.f32.mrf.mxu0
      %v778 = vadd.f32 0.0, %v777
      %779 = vdwg.mxu0
      %782 = vrot.lane.b32.xlu0 %v571, 8
      %v783 = vpop.permute.xlu0 %782
      %784 = vrot.lane.b32.xlu0 %v574, 8
      %v785 = vpop.permute.xlu0 %784
      %790 = vrot.lane.b32.xlu0 %v673, 16
      %v791 = vpop.permute.xlu0 %790
      %792 = vrot.lane.b32.xlu0 %v676, 16
      %v793 = vpop.permute.xlu0 %792
      %798 = vrot.lane.b32.xlu0 %v775, 24
      %v799 = vpop.permute.xlu0 %798
      %800 = vrot.lane.b32.xlu0 %v778, 24
      %v801 = vpop.permute.xlu0 %800
      %v804 = vsel %vm378, %v469, %v783
      %v805 = vsel %vm378, %v472, %v785
      %v806 = vsel %vm410, %v804, %v791
      %v807 = vsel %vm410, %v805, %v793
      %vm808 = vcmask 195584
      %v809 = vsel %vm808, %v806, %v799
      %v810 = vsel %vm808, %v807, %v801
      %v812 = vsel %vm285, %v809, 0
      %v815 = vsel %vm285, %v810, 0
      %817 = vmatpush.msra.mxu0 0.0
      %818 = vmatpush.msra.mxu0 0.0
      %819 = vmatpush.msra.mxu0 0.0
      %820 = vmatpush.msra.mxu0 0.0
      %821 = vmatpush.msra.mxu0 0.0
      %822 = vmatpush.msra.mxu0 0.0
      %823 = vmatpush.msra.mxu0 0.0
      %824 = vmatpush.msra.mxu0 0.0
      %825 = vmatpush.msra.mxu0 0.0
      %826 = vmatpush.msra.mxu0 0.0
      %827 = vmatpush.msra.mxu0 0.0
      %828 = vmatpush.msra.mxu0 0.0
      %829 = vmatpush.msra.mxu0 %v268
      %830 = vmatpush.msra.mxu0 %v265
      %831 = vmatpush.msra.mxu0 %v262
      %832 = vmatpush.msra.mxu0 %v259
      %833 = vmatmul.f32.gmra.mxu0 %v812
      %v834 = vpop.f32.mrf.mxu0
      %v835 = vadd.f32 0.0, %v834
      %836 = vmatmul.f32.gmra.mxu0 %v815
      %v837 = vpop.f32.mrf.mxu0
      %v838 = vadd.f32 0.0, %v837
      %839 = vdwg.mxu0
      %v840 = vadd.f32 %v255, %v835
      %v841 = vadd.f32 %v256, %v838
      %v842 = vperm.slane %v252, 2
      %v843 = vadd.f32 %v840, %v842
      %v844 = vadd.f32 %v841, %v842
      %v845 = vsel %vm285, %v843, 0.0
      %846 = vadd.xlane.f32.xlu0 %v845
      %v847 = vpop.xlane.xlu0 %846
      %v848 = vsel %vm285, %v844, 0.0
      %849 = vadd.xlane.f32.xlu0 %v848
      %v850 = vpop.xlane.xlu0 %849
      %v851 = vmul.f32 %v847, %v298
      %v852 = vmul.f32 %v850, %v298
      %v853 = vsub.f32 %v843, %v851
      %v854 = vsub.f32 %v844, %v852
      %v855 = vmul.f32 %v853, %v853
      %v856 = vmul.f32 %v854, %v854
      %v857 = vsel %vm285, %v855, 0.0
      %858 = vadd.xlane.f32.xlu0 %v857
      %v859 = vpop.xlane.xlu0 %858
      %v860 = vsel %vm285, %v856, 0.0
      %861 = vadd.xlane.f32.xlu0 %v860
      %v862 = vpop.xlane.xlu0 %861
      %v863 = vmul.f32 %v859, %v298
      %v864 = vmul.f32 %v862, %v298
      %v865 = vadd.f32 %v863, 1e-05
      %v866 = vadd.f32 %v864, 1e-05
      %v867 = vrsqrt.pop %v865
      %v868 = vmul.f32 %v867, %v865
      %v869 = vmul.f32 %v868, %v867
      %v870 = vmul.f32 0.5, %v869
      %v871 = vsub.f32 1.5, %v870
      %v872 = vmul.f32 %v867, %v871
      %vm873 = vweird.f32 %v865
      %vm874 = vweird.f32 %v867
      %vm875 = vmor %vm873, %vm874
      %v876 = vsel %vm875, %v867, %v872
      %v877 = vrsqrt.pop %v866
      %v878 = vmul.f32 %v877, %v866
      %v879 = vmul.f32 %v878, %v877
      %v880 = vmul.f32 0.5, %v879
      %v881 = vsub.f32 1.5, %v880
      %v882 = vmul.f32 %v877, %v881
      %vm883 = vweird.f32 %v866
      %vm884 = vweird.f32 %v877
      %vm885 = vmor %vm883, %vm884
      %v886 = vsel %vm885, %v877, %v882
      %v887 = vmul.f32 %v853, %v876
      %v888 = vmul.f32 %v854, %v886
      %v889 = vperm.slane %v252, 3
      %v890 = vmul.f32 %v887, %v889
      %v891 = vmul.f32 %v888, %v889
      %v892 = vperm.slane %v252, 4
      %v893 = vadd.f32 %v890, %v892
      %v894 = vadd.f32 %v891, %v892
      %v895 = vperm.slane %v254, 0
      %v897 = vsel %vm285, %v893, 0
      %v900 = vsel %vm285, %v894, 0
      %902 = vmatpush.msra.mxu0 0.0
      %903 = vmatpush.msra.mxu0 0.0
      %904 = vmatpush.msra.mxu0 0.0
      %905 = vmatpush.msra.mxu0 0.0
      %906 = vmatpush.msra.mxu0 0.0
      %907 = vmatpush.msra.mxu0 0.0
      %908 = vmatpush.msra.mxu0 0.0
      %909 = vmatpush.msra.mxu0 0.0
      %910 = vmatpush.msra.mxu0 0.0
      %911 = vmatpush.msra.mxu0 0.0
      %912 = vmatpush.msra.mxu0 0.0
      %913 = vmatpush.msra.mxu0 0.0
      %914 = vmatpush.msra.mxu0 %v267
      %915 = vmatpush.msra.mxu0 %v264
      %916 = vmatpush.msra.mxu0 %v261
      %917 = vmatpush.msra.mxu0 %v258
      %918 = vmatmul.f32.gmra.mxu0 %v897
      %v919 = vpop.f32.mrf.mxu0
      %v920 = vadd.f32 %v895, %v919
      %921 = vmatmul.f32.gmra.mxu0 %v900
      %v922 = vpop.f32.mrf.mxu0
      %v923 = vadd.f32 %v895, %v922
      %924 = vdwg.mxu0
      %v925 = vmul.f32 %v920, 0.5
      %v926 = vmul.f32 %v923, 0.5
      %v927 = vmul.f32 %v920, 0.70710677
      %v928 = vmul.f32 %v923, 0.70710677
      %vm929 = vcmp.lt.f32.partialorder %v927, 0.0
      %vm930 = vcmp.lt.f32.partialorder %v928, 0.0
      %v931 = vsel %vm929, -1.0, 1.0
      %v932 = vsel %vm930, -1.0, 1.0
      %v933 = vand.u32 2147483647, %v927
      %v934 = vand.u32 2147483647, %v928
      %v935 = vmul.f32 %v933, 0.3275911
      %v936 = vmul.f32 %v934, 0.3275911
      %v937 = vadd.f32 %v935, 1.0
      %v938 = vadd.f32 %v936, 1.0
      %v939 = vrcp.pop %v937
      %v940 = vrcp.pop %v938
      %v941 = vmul.f32 %v937, %v939
      %v942 = vmul.f32 %v938, %v940
      %v943 = vsub.f32 2.0, %v941
      %v944 = vsub.f32 2.0, %v942
      %v945 = vmul.f32 %v939, %v943
      %v946 = vmul.f32 %v940, %v944
      %v947 = vmul.f32 %v945, 1.0614054
      %v948 = vmul.f32 %v946, 1.0614054
      %v949 = vadd.f32 %v947, -1.4531521
      %v950 = vadd.f32 %v948, -1.4531521
      %v951 = vmul.f32 %v949, %v945
      %v952 = vmul.f32 %v950, %v946
      %v953 = vadd.f32 %v951, 1.4214138
      %v954 = vadd.f32 %v952, 1.4214138
      %v955 = vmul.f32 %v953, %v945
      %v956 = vmul.f32 %v954, %v946
      %v957 = vadd.f32 %v955, -0.28449672
      %v958 = vadd.f32 %v956, -0.28449672
      %v959 = vmul.f32 %v957, %v945
      %v960 = vmul.f32 %v958, %v946
      %v961 = vadd.f32 %v959, 0.2548296
      %v962 = vadd.f32 %v960, 0.2548296
      %v963 = vmul.f32 %v961, %v945
      %v964 = vmul.f32 %v962, %v946
      %v965 = vsub.f32 0.0, %v933
      %v966 = vsub.f32 0.0, %v934
      %v967 = vmul.f32 %v965, %v933
      %v968 = vmul.f32 %v966, %v934
      %v969 = vmul.f32 %v967, 1.442695
      %v970 = vpow.pop %v969
      %v971 = vmul.f32 %v968, 1.442695
      %v972 = vpow.pop %v971
      %v973 = vmul.f32 %v963, %v970
      %v974 = vmul.f32 %v964, %v972
      %v975 = vsub.f32 1.0, %v973
      %v976 = vsub.f32 1.0, %v974
      %v977 = vmul.f32 %v931, %v975
      %v978 = vmul.f32 %v932, %v976
      %v979 = vadd.f32 %v977, 1.0
      %v980 = vadd.f32 %v978, 1.0
      %v981 = vmul.f32 %v925, %v979
      %v982 = vmul.f32 %v926, %v980
      %983 = vmatpush.msra.mxu0 %v284
      %984 = vmatpush.msra.mxu0 %v283
      %985 = vmatpush.msra.mxu0 %v282
      %986 = vmatpush.msra.mxu0 %v281
      %987 = vmatpush.msra.mxu0 %v280
      %988 = vmatpush.msra.mxu0 %v279
      %989 = vmatpush.msra.mxu0 %v278
      %990 = vmatpush.msra.mxu0 %v277
      %991 = vmatpush.msra.mxu0 %v276
      %992 = vmatpush.msra.mxu0 %v275
      %993 = vmatpush.msra.mxu0 %v274
      %994 = vmatpush.msra.mxu0 %v273
      %995 = vmatpush.msra.mxu0 %v272
      %996 = vmatpush.msra.mxu0 %v271
      %997 = vmatpush.msra.mxu0 %v270
      %998 = vmatpush.msra.mxu0 %v269
      %999 = vmatmul.f32.gmra.mxu0 %v981
      %v1000 = vpop.f32.mrf.mxu0
      %v1001 = vadd.f32 0.0, %v1000
      %1002 = vmatmul.f32.gmra.mxu0 %v982
      %v1003 = vpop.f32.mrf.mxu0
      %v1004 = vadd.f32 0.0, %v1003
      %1005 = vdwg.mxu0
      %v1006 = vadd.f32 %v843, %v1001
      %v1007 = vadd.f32 %v844, %v1004
      %v1008 = vperm.slane %v252, 5
      %v1009 = vadd.f32 %v1006, %v1008
      %v1010 = vadd.f32 %v1007, %v1008
      %s1011 = scalar_lea.vmem %s1, 96
      %v1012 = vld [vmem:[%s1011] sm:$0xff]
      %v1013 = vld [vmem:[%s1011 + $0x8] sm:$0xff]
      %v1014 = vld [vmem:[%s1011 + $0x10] sm:$0xff]
      %v1015 = vld [vmem:[%s1011 + $0x18] sm:$0xff]
      %v1016 = vld [vmem:[%s1011 + $0x20] sm:$0xff]
      %v1017 = vld [vmem:[%s1011 + $0x28] sm:$0xff]
      %v1018 = vld [vmem:[%s1011 + $0x30] sm:$0xff]
      %v1019 = vld [vmem:[%s1011 + $0x38] sm:$0xff]
      %v1020 = vld [vmem:[%s1011 + $0x40] sm:$0xff]
      %v1021 = vld [vmem:[%s1011 + $0x48] sm:$0xff]
      %v1022 = vld [vmem:[%s1011 + $0x50] sm:$0xff]
      %v1023 = vld [vmem:[%s1011 + $0x58] sm:$0xff]
      %s1024 = scalar_lea.vmem %s2, 128
      %v1025 = vld [vmem:[%s1024] sm:$0xff]
      %v1026 = vld [vmem:[%s1024 + $0x8] sm:$0xff]
      %v1027 = vld [vmem:[%s1024 + $0x10] sm:$0xff]
      %v1028 = vld [vmem:[%s1024 + $0x18] sm:$0xff]
      %v1029 = vld [vmem:[%s1024 + $0x20] sm:$0xff]
      %v1030 = vld [vmem:[%s1024 + $0x28] sm:$0xff]
      %v1031 = vld [vmem:[%s1024 + $0x30] sm:$0xff]
      %v1032 = vld [vmem:[%s1024 + $0x38] sm:$0xff]
      %v1033 = vld [vmem:[%s1024 + $0x40] sm:$0xff]
      %v1034 = vld [vmem:[%s1024 + $0x48] sm:$0xff]
      %v1035 = vld [vmem:[%s1024 + $0x50] sm:$0xff]
      %v1036 = vld [vmem:[%s1024 + $0x58] sm:$0xff]
      %v1037 = vld [vmem:[%s1024 + $0x60] sm:$0xff]
      %v1038 = vld [vmem:[%s1024 + $0x68] sm:$0xff]
      %v1039 = vld [vmem:[%s1024 + $0x70] sm:$0xff]
      %v1040 = vld [vmem:[%s1024 + $0x78] sm:$0xff]
      %v1041 = vsel %vm285, %v1009, 0.0
      %1042 = vadd.xlane.f32.xlu0 %v1041
      %v1043 = vpop.xlane.xlu0 %1042
      %v1044 = vsel %vm285, %v1010, 0.0
      %1045 = vadd.xlane.f32.xlu0 %v1044
      %v1046 = vpop.xlane.xlu0 %1045
      %v1047 = vmul.f32 %v1043, %v298
      %v1048 = vmul.f32 %v1046, %v298
      %v1049 = vsub.f32 %v1009, %v1047
      %v1050 = vsub.f32 %v1010, %v1048
      %v1051 = vmul.f32 %v1049, %v1049
      %v1052 = vmul.f32 %v1050, %v1050
      %v1053 = vsel %vm285, %v1051, 0.0
      %1054 = vadd.xlane.f32.xlu0 %v1053
      %v1055 = vpop.xlane.xlu0 %1054
      %v1056 = vsel %vm285, %v1052, 0.0
      %1057 = vadd.xlane.f32.xlu0 %v1056
      %v1058 = vpop.xlane.xlu0 %1057
      %v1059 = vmul.f32 %v1055, %v298
      %v1060 = vmul.f32 %v1058, %v298
      %v1061 = vadd.f32 %v1059, 1e-05
      %v1062 = vadd.f32 %v1060, 1e-05
      %v1063 = vrsqrt.pop %v1061
      %v1064 = vmul.f32 %v1063, %v1061
      %v1065 = vmul.f32 %v1064, %v1063
      %v1066 = vmul.f32 0.5, %v1065
      %v1067 = vsub.f32 1.5, %v1066
      %v1068 = vmul.f32 %v1063, %v1067
      %vm1069 = vweird.f32 %v1061
      %vm1070 = vweird.f32 %v1063
      %vm1071 = vmor %vm1069, %vm1070
      %v1072 = vsel %vm1071, %v1063, %v1068
      %v1073 = vrsqrt.pop %v1062
      %v1074 = vmul.f32 %v1073, %v1062
      %v1075 = vmul.f32 %v1074, %v1073
      %v1076 = vmul.f32 0.5, %v1075
      %v1077 = vsub.f32 1.5, %v1076
      %v1078 = vmul.f32 %v1073, %v1077
      %vm1079 = vweird.f32 %v1062
      %vm1080 = vweird.f32 %v1073
      %vm1081 = vmor %vm1079, %vm1080
      %v1082 = vsel %vm1081, %v1073, %v1078
      %v1083 = vmul.f32 %v1049, %v1072
      %v1084 = vmul.f32 %v1050, %v1082
      %v1085 = vperm.slane %v252, 6
      %v1086 = vmul.f32 %v1083, %v1085
      %v1087 = vmul.f32 %v1084, %v1085
      %v1088 = vperm.slane %v252, 7
      %v1089 = vadd.f32 %v1086, %v1088
      %v1090 = vadd.f32 %v1087, %v1088
      %v1092 = vsel %vm285, %v1089, 0
      %v1095 = vsel %vm285, %v1090, 0
      %1097 = vmatpush.msra.mxu0 0.0
      %1098 = vmatpush.msra.mxu0 0.0
      %1099 = vmatpush.msra.mxu0 0.0
      %1100 = vmatpush.msra.mxu0 0.0
      %1101 = vmatpush.msra.mxu0 0.0
      %1102 = vmatpush.msra.mxu0 0.0
      %1103 = vmatpush.msra.mxu0 0.0
      %1104 = vmatpush.msra.mxu0 0.0
      %1105 = vmatpush.msra.mxu0 0.0
      %1106 = vmatpush.msra.mxu0 0.0
      %1107 = vmatpush.msra.mxu0 0.0
      %1108 = vmatpush.msra.mxu0 0.0
      %1109 = vmatpush.msra.mxu0 %v1021
      %1110 = vmatpush.msra.mxu0 %v1018
      %1111 = vmatpush.msra.mxu0 %v1015
      %1112 = vmatpush.msra.mxu0 %v1012
      %1113 = vmatmul.f32.gmra.mxu0 %v1092
      %v1114 = vpop.f32.mrf.mxu0
      %v1115 = vadd.f32 0.0, %v1114
      %1116 = vmatmul.f32.gmra.mxu0 %v1095
      %v1117 = vpop.f32.mrf.mxu0
      %v1118 = vadd.f32 0.0, %v1117
      %1119 = vdwg.mxu0
      %1122 = vrot.lane.b32.xlu0 %v1115, 96
      %v1123 = vpop.permute.xlu0 %1122
      %1124 = vrot.lane.b32.xlu0 %v1118, 96
      %v1125 = vpop.permute.xlu0 %1124
      %v1126 = vsel %vm378, %v1115, 0
      %v1128 = vsel %vm378, %v1118, 0
      %v1130 = vsel %vm378, %v1123, 0
      %v1132 = vsel %vm378, %v1125, 0
      %1134 = vmatpush.xpose.msra.mxu0 0.0
      %1135 = vmatpush.xpose.msra.mxu0 0.0
      %1136 = vmatpush.xpose.msra.mxu0 0.0
      %1137 = vmatpush.xpose.msra.mxu0 0.0
      %1138 = vmatpush.xpose.msra.mxu0 0.0
      %1139 = vmatpush.xpose.msra.mxu0 0.0
      %1140 = vmatpush.xpose.msra.mxu0 0.0
      %1141 = vmatpush.xpose.msra.mxu0 0.0
      %1142 = vmatpush.xpose.msra.mxu0 0.0
      %1143 = vmatpush.xpose.msra.mxu0 0.0
      %1144 = vmatpush.xpose.msra.mxu0 0.0
      %1145 = vmatpush.xpose.msra.mxu0 0.0
      %1146 = vmatpush.xpose.msra.mxu0 0.0
      %1147 = vmatpush.xpose.msra.mxu0 0.0
      %1148 = vmatpush.xpose.msra.mxu0 %v1132
      %1149 = vmatpush.xpose.msra.mxu0 %v1130
      %1150 = vmatmul.f32.gmra.mxu0 %v1126
      %v1151 = vpop.f32.mrf.mxu0
      %v1152 = vadd.f32 0.0, %v1151
      %1153 = vmatmul.f32.gmra.mxu0 %v1128
      %v1154 = vpop.f32.mrf.mxu0
      %v1155 = vadd.f32 0.0, %v1154
      %1156 = vdwg.mxu0
      %v1157 = vsel %vm410, %v1152, -inf
      %1158 = vmax.xlane.f32.xlu0 %v1157
      %v1159 = vpop.xlane.xlu0 %1158
      %v1160 = vsel %vm410, %v1155, -inf
      %1161 = vmax.xlane.f32.xlu0 %v1160
      %v1162 = vpop.xlane.xlu0 %1161
      %v1163 = vsub.f32 %v1152, %v1159
      %v1164 = vsub.f32 %v1155, %v1162
      %v1165 = vmul.f32 %v1163, 1.442695
      %v1166 = vpow.pop %v1165
      %v1167 = vmul.f32 %v1164, 1.442695
      %v1168 = vpow.pop %v1167
      %v1169 = vsel %vm410, %v1166, 0.0
      %1170 = vadd.xlane.f32.xlu0 %v1169
      %v1171 = vpop.xlane.xlu0 %1170
      %v1172 = vsel %vm410, %v1168, 0.0
      %1173 = vadd.xlane.f32.xlu0 %v1172
      %v1174 = vpop.xlane.xlu0 %1173
      %v1175 = vrcp.pop %v1171
      %v1176 = vrcp.pop %v1174
      %v1177 = vmul.f32 %v1171, %v1175
      %v1178 = vmul.f32 %v1174, %v1176
      %v1179 = vsub.f32 2.0, %v1177
      %v1180 = vsub.f32 2.0, %v1178
      %v1181 = vmul.f32 %v1175, %v1179
      %v1182 = vmul.f32 %v1176, %v1180
      %v1183 = vmul.f32 %v1166, %v1181
      %v1184 = vmul.f32 %v1168, %v1182
      %1185 = vrot.lane.b32.xlu0 %v1115, 64
      %v1186 = vpop.permute.xlu0 %1185
      %1187 = vrot.lane.b32.xlu0 %v1118, 64
      %v1188 = vpop.permute.xlu0 %1187
      %v1192 = vsel %vm410, %v1183, 0
      %v1195 = vsel %vm410, %v1184, 0
      %1197 = vmatpush.msra.mxu0 0.0
      %1198 = vmatpush.msra.mxu0 0.0
      %1199 = vmatpush.msra.mxu0 0.0
      %1200 = vmatpush.msra.mxu0 0.0
      %1201 = vmatpush.msra.mxu0 0.0
      %1202 = vmatpush.msra.mxu0 0.0
      %1203 = vmatpush.msra.mxu0 0.0
      %1204 = vmatpush.msra.mxu0 0.0
      %1205 = vmatpush.msra.mxu0 0.0
      %1206 = vmatpush.msra.mxu0 0.0
      %1207 = vmatpush.msra.mxu0 0.0
      %1208 = vmatpush.msra.mxu0 0.0
      %1209 = vmatpush.msra.mxu0 0.0
      %1210 = vmatpush.msra.mxu0 0.0
      %1211 = vmatpush.msra.mxu0 %v1188
      %1212 = vmatpush.msra.mxu0 %v1186
      %1213 = vmatmul.f32.gmra.mxu0 %v1192
      %v1214 = vpop.f32.mrf.mxu0
      %v1215 = vadd.f32 0.0, %v1214
      %1216 = vmatmul.f32.gmra.mxu0 %v1195
      %v1217 = vpop.f32.mrf.mxu0
      %v1218 = vadd.f32 0.0, %v1217
      %1219 = vdwg.mxu0
      %1220 = vrot.lane.b32.xlu0 %v1115, 120
      %v1221 = vpop.permute.xlu0 %1220
      %1222 = vrot.lane.b32.xlu0 %v1118, 120
      %v1223 = vpop.permute.xlu0 %1222
      %1224 = vrot.lane.b32.xlu0 %v1115, 88
      %v1225 = vpop.permute.xlu0 %1224
      %1226 = vrot.lane.b32.xlu0 %v1118, 88
      %v1227 = vpop.permute.xlu0 %1226
      %v1228 = vsel %vm378, %v1221, 0
      %v1230 = vsel %vm378, %v1223, 0
      %v1232 = vsel %vm378, %v1225, 0
      %v1234 = vsel %vm378, %v1227, 0
      %1236 = vmatpush.xpose.msra.mxu0 0.0
      %1237 = vmatpush.xpose.msra.mxu0 0.0
      %1238 = vmatpush.xpose.msra.mxu0 0.0
      %1239 = vmatpush.xpose.msra.mxu0 0.0
      %1240 = vmatpush.xpose.msra.mxu0 0.0
      %1241 = vmatpush.xpose.msra.mxu0 0.0
      %1242 = vmatpush.xpose.msra.mxu0 0.0
      %1243 = vmatpush.xpose.msra.mxu0 0.0
      %1244 = vmatpush.xpose.msra.mxu0 0.0
      %1245 = vmatpush.xpose.msra.mxu0 0.0
      %1246 = vmatpush.xpose.msra.mxu0 0.0
      %1247 = vmatpush.xpose.msra.mxu0 0.0
      %1248 = vmatpush.xpose.msra.mxu0 0.0
      %1249 = vmatpush.xpose.msra.mxu0 0.0
      %1250 = vmatpush.xpose.msra.mxu0 %v1234
      %1251 = vmatpush.xpose.msra.mxu0 %v1232
      %1252 = vmatmul.f32.gmra.mxu0 %v1228
      %v1253 = vpop.f32.mrf.mxu0
      %v1254 = vadd.f32 0.0, %v1253
      %1255 = vmatmul.f32.gmra.mxu0 %v1230
      %v1256 = vpop.f32.mrf.mxu0
      %v1257 = vadd.f32 0.0, %v1256
      %1258 = vdwg.mxu0
      %v1259 = vsel %vm410, %v1254, -inf
      %1260 = vmax.xlane.f32.xlu0 %v1259
      %v1261 = vpop.xlane.xlu0 %1260
      %v1262 = vsel %vm410, %v1257, -inf
      %1263 = vmax.xlane.f32.xlu0 %v1262
      %v1264 = vpop.xlane.xlu0 %1263
      %v1265 = vsub.f32 %v1254, %v1261
      %v1266 = vsub.f32 %v1257, %v1264
      %v1267 = vmul.f32 %v1265, 1.442695
      %v1268 = vpow.pop %v1267
      %v1269 = vmul.f32 %v1266, 1.442695
      %v1270 = vpow.pop %v1269
      %v1271 = vsel %vm410, %v1268, 0.0
      %1272 = vadd.xlane.f32.xlu0 %v1271
      %v1273 = vpop.xlane.xlu0 %1272
      %v1274 = vsel %vm410, %v1270, 0.0
      %1275 = vadd.xlane.f32.xlu0 %v1274
      %v1276 = vpop.xlane.xlu0 %1275
      %v1277 = vrcp.pop %v1273
      %v1278 = vrcp.pop %v1276
      %v1279 = vmul.f32 %v1273, %v1277
      %v1280 = vmul.f32 %v1276, %v1278
      %v1281 = vsub.f32 2.0, %v1279
      %v1282 = vsub.f32 2.0, %v1280
      %v1283 = vmul.f32 %v1277, %v1281
      %v1284 = vmul.f32 %v1278, %v1282
      %v1285 = vmul.f32 %v1268, %v1283
      %v1286 = vmul.f32 %v1270, %v1284
      %1287 = vrot.lane.b32.xlu0 %v1115, 56
      %v1288 = vpop.permute.xlu0 %1287
      %1289 = vrot.lane.b32.xlu0 %v1118, 56
      %v1290 = vpop.permute.xlu0 %1289
      %v1294 = vsel %vm410, %v1285, 0
      %v1297 = vsel %vm410, %v1286, 0
      %1299 = vmatpush.msra.mxu0 0.0
      %1300 = vmatpush.msra.mxu0 0.0
      %1301 = vmatpush.msra.mxu0 0.0
      %1302 = vmatpush.msra.mxu0 0.0
      %1303 = vmatpush.msra.mxu0 0.0
      %1304 = vmatpush.msra.mxu0 0.0
      %1305 = vmatpush.msra.mxu0 0.0
      %1306 = vmatpush.msra.mxu0 0.0
      %1307 = vmatpush.msra.mxu0 0.0
      %1308 = vmatpush.msra.mxu0 0.0
      %1309 = vmatpush.msra.mxu0 0.0
      %1310 = vmatpush.msra.mxu0 0.0
      %1311 = vmatpush.msra.mxu0 0.0
      %1312 = vmatpush.msra.mxu0 0.0
      %1313 = vmatpush.msra.mxu0 %v1290
      %1314 = vmatpush.msra.mxu0 %v1288
      %1315 = vmatmul.f32.gmra.mxu0 %v1294
      %v1316 = vpop.f32.mrf.mxu0
      %v1317 = vadd.f32 0.0, %v1316
      %1318 = vmatmul.f32.gmra.mxu0 %v1297
      %v1319 = vpop.f32.mrf.mxu0
      %v1320 = vadd.f32 0.0, %v1319
      %1321 = vdwg.mxu0
      %1322 = vrot.lane.b32.xlu0 %v1115, 112
      %v1323 = vpop.permute.xlu0 %1322
      %1324 = vrot.lane.b32.xlu0 %v1118, 112
      %v1325 = vpop.permute.xlu0 %1324
      %1326 = vrot.lane.b32.xlu0 %v1115, 80
      %v1327 = vpop.permute.xlu0 %1326
      %1328 = vrot.lane.b32.xlu0 %v1118, 80
      %v1329 = vpop.permute.xlu0 %1328
      %v1330 = vsel %vm378, %v1323, 0
      %v1332 = vsel %vm378, %v1325, 0
      %v1334 = vsel %vm378, %v1327, 0
      %v1336 = vsel %vm378, %v1329, 0
      %1338 = vmatpush.xpose.msra.mxu0 0.0
      %1339 = vmatpush.xpose.msra.mxu0 0.0
      %1340 = vmatpush.xpose.msra.mxu0 0.0
      %1341 = vmatpush.xpose.msra.mxu0 0.0
      %1342 = vmatpush.xpose.msra.mxu0 0.0
      %1343 = vmatpush.xpose.msra.mxu0 0.0
      %1344 = vmatpush.xpose.msra.mxu0 0.0
      %1345 = vmatpush.xpose.msra.mxu0 0.0
      %1346 = vmatpush.xpose.msra.mxu0 0.0
      %1347 = vmatpush.xpose.msra.mxu0 0.0
      %1348 = vmatpush.xpose.msra.mxu0 0.0
      %1349 = vmatpush.xpose.msra.mxu0 0.0
      %1350 = vmatpush.xpose.msra.mxu0 0.0
      %1351 = vmatpush.xpose.msra.mxu0 0.0
      %1352 = vmatpush.xpose.msra.mxu0 %v1336
      %1353 = vmatpush.xpose.msra.mxu0 %v1334
      %1354 = vmatmul.f32.gmra.mxu0 %v1330
      %v1355 = vpop.f32.mrf.mxu0
      %v1356 = vadd.f32 0.0, %v1355
      %1357 = vmatmul.f32.gmra.mxu0 %v1332
      %v1358 = vpop.f32.mrf.mxu0
      %v1359 = vadd.f32 0.0, %v1358
      %1360 = vdwg.mxu0
      %v1361 = vsel %vm410, %v1356, -inf
      %1362 = vmax.xlane.f32.xlu0 %v1361
      %v1363 = vpop.xlane.xlu0 %1362
      %v1364 = vsel %vm410, %v1359, -inf
      %1365 = vmax.xlane.f32.xlu0 %v1364
      %v1366 = vpop.xlane.xlu0 %1365
      %v1367 = vsub.f32 %v1356, %v1363
      %v1368 = vsub.f32 %v1359, %v1366
      %v1369 = vmul.f32 %v1367, 1.442695
      %v1370 = vpow.pop %v1369
      %v1371 = vmul.f32 %v1368, 1.442695
      %v1372 = vpow.pop %v1371
      %v1373 = vsel %vm410, %v1370, 0.0
      %1374 = vadd.xlane.f32.xlu0 %v1373
      %v1375 = vpop.xlane.xlu0 %1374
      %v1376 = vsel %vm410, %v1372, 0.0
      %1377 = vadd.xlane.f32.xlu0 %v1376
      %v1378 = vpop.xlane.xlu0 %1377
      %v1379 = vrcp.pop %v1375
      %v1380 = vrcp.pop %v1378
      %v1381 = vmul.f32 %v1375, %v1379
      %v1382 = vmul.f32 %v1378, %v1380
      %v1383 = vsub.f32 2.0, %v1381
      %v1384 = vsub.f32 2.0, %v1382
      %v1385 = vmul.f32 %v1379, %v1383
      %v1386 = vmul.f32 %v1380, %v1384
      %v1387 = vmul.f32 %v1370, %v1385
      %v1388 = vmul.f32 %v1372, %v1386
      %1389 = vrot.lane.b32.xlu0 %v1115, 48
      %v1390 = vpop.permute.xlu0 %1389
      %1391 = vrot.lane.b32.xlu0 %v1118, 48
      %v1392 = vpop.permute.xlu0 %1391
      %v1396 = vsel %vm410, %v1387, 0
      %v1399 = vsel %vm410, %v1388, 0
      %1401 = vmatpush.msra.mxu0 0.0
      %1402 = vmatpush.msra.mxu0 0.0
      %1403 = vmatpush.msra.mxu0 0.0
      %1404 = vmatpush.msra.mxu0 0.0
      %1405 = vmatpush.msra.mxu0 0.0
      %1406 = vmatpush.msra.mxu0 0.0
      %1407 = vmatpush.msra.mxu0 0.0
      %1408 = vmatpush.msra.mxu0 0.0
      %1409 = vmatpush.msra.mxu0 0.0
      %1410 = vmatpush.msra.mxu0 0.0
      %1411 = vmatpush.msra.mxu0 0.0
      %1412 = vmatpush.msra.mxu0 0.0
      %1413 = vmatpush.msra.mxu0 0.0
      %1414 = vmatpush.msra.mxu0 0.0
      %1415 = vmatpush.msra.mxu0 %v1392
      %1416 = vmatpush.msra.mxu0 %v1390
      %1417 = vmatmul.f32.gmra.mxu0 %v1396
      %v1418 = vpop.f32.mrf.mxu0
      %v1419 = vadd.f32 0.0, %v1418
      %1420 = vmatmul.f32.gmra.mxu0 %v1399
      %v1421 = vpop.f32.mrf.mxu0
      %v1422 = vadd.f32 0.0, %v1421
      %1423 = vdwg.mxu0
      %1424 = vrot.lane.b32.xlu0 %v1115, 104
      %v1425 = vpop.permute.xlu0 %1424
      %1426 = vrot.lane.b32.xlu0 %v1118, 104
      %v1427 = vpop.permute.xlu0 %1426
      %1428 = vrot.lane.b32.xlu0 %v1115, 72
      %v1429 = vpop.permute.xlu0 %1428
      %1430 = vrot.lane.b32.xlu0 %v1118, 72
      %v1431 = vpop.permute.xlu0 %1430
      %v1432 = vsel %vm378, %v1425, 0
      %v1434 = vsel %vm378, %v1427, 0
      %v1436 = vsel %vm378, %v1429, 0
      %v1438 = vsel %vm378, %v1431, 0
      %1440 = vmatpush.xpose.msra.mxu0 0.0
      %1441 = vmatpush.xpose.msra.mxu0 0.0
      %1442 = vmatpush.xpose.msra.mxu0 0.0
      %1443 = vmatpush.xpose.msra.mxu0 0.0
      %1444 = vmatpush.xpose.msra.mxu0 0.0
      %1445 = vmatpush.xpose.msra.mxu0 0.0
      %1446 = vmatpush.xpose.msra.mxu0 0.0
      %1447 = vmatpush.xpose.msra.mxu0 0.0
      %1448 = vmatpush.xpose.msra.mxu0 0.0
      %1449 = vmatpush.xpose.msra.mxu0 0.0
      %1450 = vmatpush.xpose.msra.mxu0 0.0
      %1451 = vmatpush.xpose.msra.mxu0 0.0
      %1452 = vmatpush.xpose.msra.mxu0 0.0
      %1453 = vmatpush.xpose.msra.mxu0 0.0
      %1454 = vmatpush.xpose.msra.mxu0 %v1438
      %1455 = vmatpush.xpose.msra.mxu0 %v1436
      %1456 = vmatmul.f32.gmra.mxu0 %v1432
      %v1457 = vpop.f32.mrf.mxu0
      %v1458 = vadd.f32 0.0, %v1457
      %1459 = vmatmul.f32.gmra.mxu0 %v1434
      %v1460 = vpop.f32.mrf.mxu0
      %v1461 = vadd.f32 0.0, %v1460
      %1462 = vdwg.mxu0
      %v1463 = vsel %vm410, %v1458, -inf
      %1464 = vmax.xlane.f32.xlu0 %v1463
      %v1465 = vpop.xlane.xlu0 %1464
      %v1466 = vsel %vm410, %v1461, -inf
      %1467 = vmax.xlane.f32.xlu0 %v1466
      %v1468 = vpop.xlane.xlu0 %1467
      %v1469 = vsub.f32 %v1458, %v1465
      %v1470 = vsub.f32 %v1461, %v1468
      %v1471 = vmul.f32 %v1469, 1.442695
      %v1472 = vpow.pop %v1471
      %v1473 = vmul.f32 %v1470, 1.442695
      %v1474 = vpow.pop %v1473
      %v1475 = vsel %vm410, %v1472, 0.0
      %1476 = vadd.xlane.f32.xlu0 %v1475
      %v1477 = vpop.xlane.xlu0 %1476
      %v1478 = vsel %vm410, %v1474, 0.0
      %1479 = vadd.xlane.f32.xlu0 %v1478
      %v1480 = vpop.xlane.xlu0 %1479
      %v1481 = vrcp.pop %v1477
      %v1482 = vrcp.pop %v1480
      %v1483 = vmul.f32 %v1477, %v1481
      %v1484 = vmul.f32 %v1480, %v1482
      %v1485 = vsub.f32 2.0, %v1483
      %v1486 = vsub.f32 2.0, %v1484
      %v1487 = vmul.f32 %v1481, %v1485
      %v1488 = vmul.f32 %v1482, %v1486
      %v1489 = vmul.f32 %v1472, %v1487
      %v1490 = vmul.f32 %v1474, %v1488
      %1491 = vrot.lane.b32.xlu0 %v1115, 40
      %v1492 = vpop.permute.xlu0 %1491
      %1493 = vrot.lane.b32.xlu0 %v1118, 40
      %v1494 = vpop.permute.xlu0 %1493
      %v1498 = vsel %vm410, %v1489, 0
      %v1501 = vsel %vm410, %v1490, 0
      %1503 = vmatpush.msra.mxu0 0.0
      %1504 = vmatpush.msra.mxu0 0.0
      %1505 = vmatpush.msra.mxu0 0.0
      %1506 = vmatpush.msra.mxu0 0.0
      %1507 = vmatpush.msra.mxu0 0.0
      %1508 = vmatpush.msra.mxu0 0.0
      %1509 = vmatpush.msra.mxu0 0.0
      %1510 = vmatpush.msra.mxu0 0.0
      %1511 = vmatpush.msra.mxu0 0.0
      %1512 = vmatpush.msra.mxu0 0.0
      %1513 = vmatpush.msra.mxu0 0.0
      %1514 = vmatpush.msra.mxu0 0.0
      %1515 = vmatpush.msra.mxu0 0.0
      %1516 = vmatpush.msra.mxu0 0.0
      %1517 = vmatpush.msra.mxu0 %v1494
      %1518 = vmatpush.msra.mxu0 %v1492
      %1519 = vmatmul.f32.gmra.mxu0 %v1498
      %v1520 = vpop.f32.mrf.mxu0
      %v1521 = vadd.f32 0.0, %v1520
      %1522 = vmatmul.f32.gmra.mxu0 %v1501
      %v1523 = vpop.f32.mrf.mxu0
      %v1524 = vadd.f32 0.0, %v1523
      %1525 = vdwg.mxu0
      %1528 = vrot.lane.b32.xlu0 %v1317, 8
      %v1529 = vpop.permute.xlu0 %1528
      %1530 = vrot.lane.b32.xlu0 %v1320, 8
      %v1531 = vpop.permute.xlu0 %1530
      %1536 = vrot.lane.b32.xlu0 %v1419, 16
      %v1537 = vpop.permute.xlu0 %1536
      %1538 = vrot.lane.b32.xlu0 %v1422, 16
      %v1539 = vpop.permute.xlu0 %1538
      %1544 = vrot.lane.b32.xlu0 %v1521, 24
      %v1545 = vpop.permute.xlu0 %1544
      %1546 = vrot.lane.b32.xlu0 %v1524, 24
      %v1547 = vpop.permute.xlu0 %1546
      %v1550 = vsel %vm378, %v1215, %v1529
      %v1551 = vsel %vm378, %v1218, %v1531
      %v1552 = vsel %vm410, %v1550, %v1537
      %v1553 = vsel %vm410, %v1551, %v1539
      %v1554 = vsel %vm808, %v1552, %v1545
      %v1555 = vsel %vm808, %v1553, %v1547
      %v1557 = vsel %vm285, %v1554, 0
      %v1560 = vsel %vm285, %v1555, 0
      %1562 = vmatpush.msra.mxu0 0.0
      %1563 = vmatpush.msra.mxu0 0.0
      %1564 = vmatpush.msra.mxu0 0.0
      %1565 = vmatpush.msra.mxu0 0.0
      %1566 = vmatpush.msra.mxu0 0.0
      %1567 = vmatpush.msra.mxu0 0.0
      %1568 = vmatpush.msra.mxu0 0.0
      %1569 = vmatpush.msra.mxu0 0.0
      %1570 = vmatpush.msra.mxu0 0.0
      %1571 = vmatpush.msra.mxu0 0.0
      %1572 = vmatpush.msra.mxu0 0.0
      %1573 = vmatpush.msra.mxu0 0.0
      %1574 = vmatpush.msra.mxu0 %v1023
      %1575 = vmatpush.msra.mxu0 %v1020
      %1576 = vmatpush.msra.mxu0 %v1017
      %1577 = vmatpush.msra.mxu0 %v1014
      %1578 = vmatmul.f32.gmra.mxu0 %v1557
      %v1579 = vpop.f32.mrf.mxu0
      %v1580 = vadd.f32 0.0, %v1579
      %1581 = vmatmul.f32.gmra.mxu0 %v1560
      %v1582 = vpop.f32.mrf.mxu0
      %v1583 = vadd.f32 0.0, %v1582
      %1584 = vdwg.mxu0
      %v1585 = vadd.f32 %v1009, %v1580
      %v1586 = vadd.f32 %v1010, %v1583
      %v1587 = vperm.slane %v253, 0
      %v1588 = vadd.f32 %v1585, %v1587
      %v1589 = vadd.f32 %v1586, %v1587
      %v1590 = vsel %vm285, %v1588, 0.0
      %1591 = vadd.xlane.f32.xlu0 %v1590
      %v1592 = vpop.xlane.xlu0 %1591
      %v1593 = vsel %vm285, %v1589, 0.0
      %1594 = vadd.xlane.f32.xlu0 %v1593
      %v1595 = vpop.xlane.xlu0 %1594
      %v1596 = vmul.f32 %v1592, %v298
      %v1597 = vmul.f32 %v1595, %v298
      %v1598 = vsub.f32 %v1588, %v1596
      %v1599 = vsub.f32 %v1589, %v1597
      %v1600 = vmul.f32 %v1598, %v1598
      %v1601 = vmul.f32 %v1599, %v1599
      %v1602 = vsel %vm285, %v1600, 0.0
      %1603 = vadd.xlane.f32.xlu0 %v1602
      %v1604 = vpop.xlane.xlu0 %1603
      %v1605 = vsel %vm285, %v1601, 0.0
      %1606 = vadd.xlane.f32.xlu0 %v1605
      %v1607 = vpop.xlane.xlu0 %1606
      %v1608 = vmul.f32 %v1604, %v298
      %v1609 = vmul.f32 %v1607, %v298
      %v1610 = vadd.f32 %v1608, 1e-05
      %v1611 = vadd.f32 %v1609, 1e-05
      %v1612 = vrsqrt.pop %v1610
      %v1613 = vmul.f32 %v1612, %v1610
      %v1614 = vmul.f32 %v1613, %v1612
      %v1615 = vmul.f32 0.5, %v1614
      %v1616 = vsub.f32 1.5, %v1615
      %v1617 = vmul.f32 %v1612, %v1616
      %vm1618 = vweird.f32 %v1610
      %vm1619 = vweird.f32 %v1612
      %vm1620 = vmor %vm1618, %vm1619
      %v1621 = vsel %vm1620, %v1612, %v1617
      %v1622 = vrsqrt.pop %v1611
      %v1623 = vmul.f32 %v1622, %v1611
      %v1624 = vmul.f32 %v1623, %v1622
      %v1625 = vmul.f32 0.5, %v1624
      %v1626 = vsub.f32 1.5, %v1625
      %v1627 = vmul.f32 %v1622, %v1626
      %vm1628 = vweird.f32 %v1611
      %vm1629 = vweird.f32 %v1622
      %vm1630 = vmor %vm1628, %vm1629
      %v1631 = vsel %vm1630, %v1622, %v1627
      %v1632 = vmul.f32 %v1598, %v1621
      %v1633 = vmul.f32 %v1599, %v1631
      %v1634 = vperm.slane %v253, 1
      %v1635 = vmul.f32 %v1632, %v1634
      %v1636 = vmul.f32 %v1633, %v1634
      %v1637 = vperm.slane %v253, 2
      %v1638 = vadd.f32 %v1635, %v1637
      %v1639 = vadd.f32 %v1636, %v1637
      %v1640 = vperm.slane %v254, 1
      %v1642 = vsel %vm285, %v1638, 0
      %v1645 = vsel %vm285, %v1639, 0
      %1647 = vmatpush.msra.mxu0 0.0
      %1648 = vmatpush.msra.mxu0 0.0
      %1649 = vmatpush.msra.mxu0 0.0
      %1650 = vmatpush.msra.mxu0 0.0
      %1651 = vmatpush.msra.mxu0 0.0
      %1652 = vmatpush.msra.mxu0 0.0
      %1653 = vmatpush.msra.mxu0 0.0
      %1654 = vmatpush.msra.mxu0 0.0
      %1655 = vmatpush.msra.mxu0 0.0
      %1656 = vmatpush.msra.mxu0 0.0
      %1657 = vmatpush.msra.mxu0 0.0
      %1658 = vmatpush.msra.mxu0 0.0
      %1659 = vmatpush.msra.mxu0 %v1022
      %1660 = vmatpush.msra.mxu0 %v1019
      %1661 = vmatpush.msra.mxu0 %v1016
      %1662 = vmatpush.msra.mxu0 %v1013
      %1663 = vmatmul.f32.gmra.mxu0 %v1642
      %v1664 = vpop.f32.mrf.mxu0
      %v1665 = vadd.f32 %v1640, %v1664
      %1666 = vmatmul.f32.gmra.mxu0 %v1645
      %v1667 = vpop.f32.mrf.mxu0
      %v1668 = vadd.f32 %v1640, %v1667
      %1669 = vdwg.mxu0
      %v1670 = vmul.f32 %v1665, 0.5
      %v1671 = vmul.f32 %v1668, 0.5
      %v1672 = vmul.f32 %v1665, 0.70710677
      %v1673 = vmul.f32 %v1668, 0.70710677
      %vm1674 = vcmp.lt.f32.partialorder %v1672, 0.0
      %vm1675 = vcmp.lt.f32.partialorder %v1673, 0.0
      %v1676 = vsel %vm1674, -1.0, 1.0
      %v1677 = vsel %vm1675, -1.0, 1.0
      %v1678 = vand.u32 2147483647, %v1672
      %v1679 = vand.u32 2147483647, %v1673
      %v1680 = vmul.f32 %v1678, 0.3275911
      %v1681 = vmul.f32 %v1679, 0.3275911
      %v1682 = vadd.f32 %v1680, 1.0
      %v1683 = vadd.f32 %v1681, 1.0
      %v1684 = vrcp.pop %v1682
      %v1685 = vrcp.pop %v1683
      %v1686 = vmul.f32 %v1682, %v1684
      %v1687 = vmul.f32 %v1683, %v1685
      %v1688 = vsub.f32 2.0, %v1686
      %v1689 = vsub.f32 2.0, %v1687
      %v1690 = vmul.f32 %v1684, %v1688
      %v1691 = vmul.f32 %v1685, %v1689
      %v1692 = vmul.f32 %v1690, 1.0614054
      %v1693 = vmul.f32 %v1691, 1.0614054
      %v1694 = vadd.f32 %v1692, -1.4531521
      %v1695 = vadd.f32 %v1693, -1.4531521
      %v1696 = vmul.f32 %v1694, %v1690
      %v1697 = vmul.f32 %v1695, %v1691
      %v1698 = vadd.f32 %v1696, 1.4214138
      %v1699 = vadd.f32 %v1697, 1.4214138
      %v1700 = vmul.f32 %v1698, %v1690
      %v1701 = vmul.f32 %v1699, %v1691
      %v1702 = vadd.f32 %v1700, -0.28449672
      %v1703 = vadd.f32 %v1701, -0.28449672
      %v1704 = vmul.f32 %v1702, %v1690
      %v1705 = vmul.f32 %v1703, %v1691
      %v1706 = vadd.f32 %v1704, 0.2548296
      %v1707 = vadd.f32 %v1705, 0.2548296
      %v1708 = vmul.f32 %v1706, %v1690
      %v1709 = vmul.f32 %v1707, %v1691
      %v1710 = vsub.f32 0.0, %v1678
      %v1711 = vsub.f32 0.0, %v1679
      %v1712 = vmul.f32 %v1710, %v1678
      %v1713 = vmul.f32 %v1711, %v1679
      %v1714 = vmul.f32 %v1712, 1.442695
      %v1715 = vpow.pop %v1714
      %v1716 = vmul.f32 %v1713, 1.442695
      %v1717 = vpow.pop %v1716
      %v1718 = vmul.f32 %v1708, %v1715
      %v1719 = vmul.f32 %v1709, %v1717
      %v1720 = vsub.f32 1.0, %v1718
      %v1721 = vsub.f32 1.0, %v1719
      %v1722 = vmul.f32 %v1676, %v1720
      %v1723 = vmul.f32 %v1677, %v1721
      %v1724 = vadd.f32 %v1722, 1.0
      %v1725 = vadd.f32 %v1723, 1.0
      %v1726 = vmul.f32 %v1670, %v1724
      %v1727 = vmul.f32 %v1671, %v1725
      %1728 = vmatpush.msra.mxu0 %v1040
      %1729 = vmatpush.msra.mxu0 %v1039
      %1730 = vmatpush.msra.mxu0 %v1038
      %1731 = vmatpush.msra.mxu0 %v1037
      %1732 = vmatpush.msra.mxu0 %v1036
      %1733 = vmatpush.msra.mxu0 %v1035
      %1734 = vmatpush.msra.mxu0 %v1034
      %1735 = vmatpush.msra.mxu0 %v1033
      %1736 = vmatpush.msra.mxu0 %v1032
      %1737 = vmatpush.msra.mxu0 %v1031
      %1738 = vmatpush.msra.mxu0 %v1030
      %1739 = vmatpush.msra.mxu0 %v1029
      %1740 = vmatpush.msra.mxu0 %v1028
      %1741 = vmatpush.msra.mxu0 %v1027
      %1742 = vmatpush.msra.mxu0 %v1026
      %1743 = vmatpush.msra.mxu0 %v1025
      %1744 = vmatmul.f32.gmra.mxu0 %v1726
      %v1745 = vpop.f32.mrf.mxu0
      %v1746 = vadd.f32 0.0, %v1745
      %1747 = vmatmul.f32.gmra.mxu0 %v1727
      %v1748 = vpop.f32.mrf.mxu0
      %v1749 = vadd.f32 0.0, %v1748
      %1750 = vdwg.mxu0
      %v1751 = vadd.f32 %v1588, %v1746
      %v1752 = vadd.f32 %v1589, %v1749
      %v1753 = vperm.slane %v253, 3
      %v1754 = vadd.f32 %v1751, %v1753
      %v1755 = vadd.f32 %v1752, %v1753
      %v1756 = vsel %vm285, %v1754, 0.0
      %1757 = vadd.xlane.f32.xlu0 %v1756
      %v1758 = vpop.xlane.xlu0 %1757
      %v1759 = vsel %vm285, %v1755, 0.0
      %1760 = vadd.xlane.f32.xlu0 %v1759
      %v1761 = vpop.xlane.xlu0 %1760
      %v1762 = vmul.f32 %v1758, %v298
      %v1763 = vmul.f32 %v1761, %v298
      %v1764 = vsub.f32 %v1754, %v1762
      %v1765 = vsub.f32 %v1755, %v1763
      %v1766 = vmul.f32 %v1764, %v1764
      %v1767 = vmul.f32 %v1765, %v1765
      %v1768 = vsel %vm285, %v1766, 0.0
      %1769 = vadd.xlane.f32.xlu0 %v1768
      %v1770 = vpop.xlane.xlu0 %1769
      %v1771 = vsel %vm285, %v1767, 0.0
      %1772 = vadd.xlane.f32.xlu0 %v1771
      %v1773 = vpop.xlane.xlu0 %1772
      %v1774 = vmul.f32 %v1770, %v298
      %v1775 = vmul.f32 %v1773, %v298
      %v1776 = vadd.f32 %v1774, 1e-05
      %v1777 = vadd.f32 %v1775, 1e-05
      %v1778 = vrsqrt.pop %v1776
      %v1779 = vmul.f32 %v1778, %v1776
      %v1780 = vmul.f32 %v1779, %v1778
      %v1781 = vmul.f32 0.5, %v1780
      %v1782 = vsub.f32 1.5, %v1781
      %v1783 = vmul.f32 %v1778, %v1782
      %vm1784 = vweird.f32 %v1776
      %vm1785 = vweird.f32 %v1778
      %vm1786 = vmor %vm1784, %vm1785
      %v1787 = vsel %vm1786, %v1778, %v1783
      %v1788 = vrsqrt.pop %v1777
      %v1789 = vmul.f32 %v1788, %v1777
      %v1790 = vmul.f32 %v1789, %v1788
      %v1791 = vmul.f32 0.5, %v1790
      %v1792 = vsub.f32 1.5, %v1791
      %v1793 = vmul.f32 %v1788, %v1792
      %vm1794 = vweird.f32 %v1777
      %vm1795 = vweird.f32 %v1788
      %vm1796 = vmor %vm1794, %vm1795
      %v1797 = vsel %vm1796, %v1788, %v1793
      %v1798 = vmul.f32 %v1764, %v1787
      %v1799 = vmul.f32 %v1765, %v1797
      %v1800 = vperm.slane %v253, 4
      %v1801 = vmul.f32 %v1798, %v1800
      %v1802 = vmul.f32 %v1799, %v1800
      %v1803 = vperm.slane %v253, 5
      %v1804 = vadd.f32 %v1801, %v1803
      %v1805 = vadd.f32 %v1802, %v1803
      %v1806 = vld [vmem:[%s3] sm:$0xff]
      %v1807 = vld [vmem:[%s3 + $0x8] sm:$0xff]
      %v1808 = vld [vmem:[%s3 + $0x10] sm:$0xff]
      %v1809 = vld [vmem:[%s3 + $0x18] sm:$0xff]
      %v1810 = vperm.slane %v254, 2
      %v1812 = vsel %vm285, %v1804, 0
      %v1815 = vsel %vm285, %v1805, 0
      %1817 = vmatpush.msra.mxu0 0.0
      %1818 = vmatpush.msra.mxu0 0.0
      %1819 = vmatpush.msra.mxu0 0.0
      %1820 = vmatpush.msra.mxu0 0.0
      %1821 = vmatpush.msra.mxu0 0.0
      %1822 = vmatpush.msra.mxu0 0.0
      %1823 = vmatpush.msra.mxu0 0.0
      %1824 = vmatpush.msra.mxu0 0.0
      %1825 = vmatpush.msra.mxu0 0.0
      %1826 = vmatpush.msra.mxu0 0.0
      %1827 = vmatpush.msra.mxu0 0.0
      %1828 = vmatpush.msra.mxu0 0.0
      %1829 = vmatpush.msra.mxu0 %v1809
      %1830 = vmatpush.msra.mxu0 %v1808
      %1831 = vmatpush.msra.mxu0 %v1807
      %1832 = vmatpush.msra.mxu0 %v1806
      %1833 = vmatmul.f32.gmra.mxu0 %v1812
      %v1834 = vpop.f32.mrf.mxu0
      %v1835 = vadd.f32 %v1810, %v1834
      %1836 = vmatmul.f32.gmra.mxu0 %v1815
      %v1837 = vpop.f32.mrf.mxu0
      %v1838 = vadd.f32 %v1810, %v1837
      %1839 = vdwg.mxu0
      %1840 = vst [vmem:[%s251] sm:$0xff] %v1835
      %1841 = vst [vmem:[%s251 + $0x8] sm:$0xff] %v1838
      %p1842 = scmp.lt.s32.totalorder %s17, 1
      %s1843 = scalar_select %p1842, %s17, 1
      %s1844 = smul.addr %s1843, 2
      %s1845 = smul.addr %s1844, 8
      %s1846 = scalar_lea.vmem %s6, %s1845
      // Predicated region
      $region45: #{transpan_forward.1} parent=43 // pred_check
        %p1847 = pneg %p166
      $region46: #{transpan_forward.1} parent=43 // pred_check_branch
        %1849 = sbr.rel (%p1847) target = $region48
      $region47: #{transpan_forward.1} parent=43 // pred_region
        _
      $region48: #{transpan_forward.1} parent=43 // pred_fallthru
        _
    $region44: #{transpan_forward.1} parent=5 // pred_fallthru
      _
    %p1850 = scmp.le.s32.totalorder 2, %s12
    // Predicated region
    $region49: #{transpan_forward.1} parent=5 // pred_check
      %p1851 = pneg %p1850
    $region50: #{transpan_forward.1} parent=5 // pred_check_branch
      %1853 = sbr.rel (%p1851) target = $region52
    $region51: #{transpan_forward.1} parent=5 // pred_region
      %s1854 = ssub.s32 %s12, 2
      // Predicated region
      $region53: #{transpan_forward.1} parent=51 // pred_check
        %p1855 = pneg %p172
      $region54: #{transpan_forward.1} parent=51 // pred_check_branch
        %1857 = sbr.rel (%p1855) target = $region56
      $region55: #{transpan_forward.1} parent=51 // pred_region
        %p1858 = scmp.lt.s32.totalorder %s18, 1
        %s1859 = scalar_select %p1858, %s18, 1
        %s1860 = smul.addr %s1859, 2
        %s1861 = smul.addr %s1860, 8
        %s1862 = scalar_lea.vmem %s6, %s1861
      $region56: #{transpan_forward.1} parent=51 // pred_fallthru
        _
    $region52: #{transpan_forward.1} parent=5 // pred_fallthru
      _
  $region6: #{transpan_forward.1} parent=0 // loop_footer
    %s16 = sadd.s32 1, %s12
  $region7: #{transpan_forward.1} parent=0 // loop_footer_branch
    %11 = sbr.rel target = $region3
  $region8: #{transpan_forward.1} parent=0 // loop_exit
    _

</llo_original>
